<compile_context>
chip_gen: v7x
topology: tpu7x:2x2x1
jax: 0.10.0
libtpu: 0.0.40
codegen_flags: <defaults>
</compile_context>

<pallas_src>
import jax
import jax.numpy as jnp
import numpy as np
from jax import lax
from jax.experimental import pallas as pl
from jax.experimental.pallas import tpu as pltpu  # noqa: F401  (kept per interface)


# ----------------------------------------------------------------------------
# Configuration (mirrors what the module's __init__ implies, at small sizes)
# ----------------------------------------------------------------------------
EMB_SIZE = 384            # self.embeddings_size for the smp.Unet encoder path
IN_CHANNELS = 4
C_PAD = 8                 # conv contraction dim padded to a sublane multiple
H = W = 16
BATCH = 2

# Synthetic label hierarchy (get_level_indices / get_dataset_labels stand-in;
# level indices are contiguous, so the logits scatter is a contiguous placement)
LEVEL1, LEVEL2, LEVEL3, LEVEL4 = 4, 8, 12, 16
ADD_DUMMY = True                       # add_dummy_label = not useOtherLosses
DUMMY = int(ADD_DUMMY)
L1_SIZE = LEVEL1
L2_SIZE = LEVEL2
L3_SIZE = LEVEL3 + DUMMY               # 13
L4_SIZE = LEVEL4 + DUMMY               # 17
ALL_LABELS = LEVEL1 + LEVEL2 + LEVEL3 + LEVEL4     # 40

# Final lane layout of the packed (N, 128) logits slab: levels at their FINAL
# logits offsets, the two dummy columns parked at lanes >= ALL_LABELS.
PAD_TO = 128
L1_LO, L1_HI = 0, LEVEL1                       # x1
L2_LO, L2_HI = L1_HI, L1_HI + LEVEL2           # x2
L3_LO, L3_HI = L2_HI, L2_HI + LEVEL3           # x3[:, DUMMY:]
L4_LO, L4_HI = L3_HI, L3_HI + LEVEL4           # x4[:, DUMMY:]
DUMMY3_LANE = ALL_LABELS                       # 40
DUMMY4_LANE = ALL_LABELS + 1                   # 41

# Row layout of the small packed parameter slab (bias + correction weights).
ROW_BIAS = 0
ROW_W2B = 1                                    # 4 rows  (inputs: x1)
ROW_W3B = ROW_W2B + L1_SIZE                    # 8 rows  (inputs: x2)
ROW_W4B = ROW_W3B + L2_SIZE                    # 13 rows (inputs: x3, dummy first)
SLAB_ROWS = 32                                 # 26 used, padded to 8-multiple

OUT_LANES = PAD_TO + EMB_SIZE                  # packed logits(128) | emb(384)


# ----------------------------------------------------------------------------
# Fused kernel: encoder stand-in -> pooling matmul -> hierarchical heads ->
#               single lane-dense (N, 512) output slab (logits | embeddings)
# ----------------------------------------------------------------------------
def fused_kernel(x_ref, wc_ref, wemb_ref, slab_ref, out_ref):
    n = out_ref.shape[0]
    nhw = x_ref.shape[0]
    hw = nhw // n
    emb_size = wc_ref.shape[1]

    # --- encoder stand-in: 1x1 conv + ReLU (bias folded into wc row 4) ------
    h = jnp.dot(x_ref[...], wc_ref[...], preferred_element_type=jnp.float32)
    h = jnp.maximum(h, 0.0).astype(jnp.bfloat16)          # (N*HW, EMB)

    # --- AdaptiveAvgPool2d(1)+Flatten as an MXU pooling matmul --------------
    # pool matrix is synthesized in-kernel (no HBM operand, no N^2*HW DMA).
    row = lax.broadcasted_iota(jnp.int32, (n, nhw), 0)
    col = lax.broadcasted_iota(jnp.int32, (n, nhw), 1)
    seg = (col >= row * hw) & (col < (row + 1) * hw)
    pool = jnp.where(seg, 1.0 / hw, 0.0).astype(jnp.bfloat16)
    emb = jnp.dot(pool, h, preferred_element_type=jnp.float32)     # (N, EMB) f32

    # --- one MXU pass for ALL emb-side head matmuls (final-lane placement) --
    slab = slab_ref[...]                                    # (32, 128) f32
    z = jnp.dot(emb.astype(jnp.bfloat16), wemb_ref[...],
                preferred_element_type=jnp.float32)
    z = z + slab[ROW_BIAS:ROW_BIAS + 1, :]                  # packed biases

    # hoisted lane-index masks (off the serial chain)
    lane = lax.broadcasted_iota(jnp.int32, (n, PAD_TO), 1)
    m1 = lane < L1_HI
    m2 = (lane >= L2_LO) & (lane < L2_HI)
    m3 = ((lane >= L3_LO) & (lane < L3_HI)) | (lane == DUMMY3_LANE)

    def corr(zv, src_lanes, row0):
        # tiny chained contraction as unrolled VPU broadcast MACs; weights are
        # pre-placed at the final output lanes so the result adds straight
        # into z (source and target lanes are disjoint).
        acc = zv[:, src_lanes[0]:src_lanes[0] + 1] * slab[row0:row0 + 1, :]
        for i, s in enumerate(src_lanes[1:], start=1):
            acc = acc + zv[:, s:s + 1] * slab[row0 + i:row0 + i + 1, :]
        return acc

    # --- strategy-2 chained heads (ReLU activation, none on the last) -------
    z = jnp.where(m1, jnp.maximum(z, 0.0), z)                       # x1
    z = z + corr(z, list(range(L1_LO, L1_HI)), ROW_W2B)             # + x1 @ w2b
    z = jnp.where(m2, jnp.maximum(z, 0.0), z)                       # x2
    z = z + corr(z, list(range(L2_LO, L2_HI)), ROW_W3B)             # + x2 @ w3b
    z = jnp.where(m3, jnp.maximum(z, 0.0), z)                       # x3 (incl dummy)
    z = z + corr(z, [DUMMY3_LANE] + list(range(L3_LO, L3_HI)), ROW_W4B)  # + x3 @ w4b
    # level-4 lanes [24,40) + lane 41: no activation

    # --- single output slab, two 128-lane-aligned unmasked stores -----------
    out_ref[:, 0:PAD_TO] = z
    out_ref[:, PAD_TO:PAD_TO + emb_size] = emb


# ----------------------------------------------------------------------------
# Wrapper: layout plumbing + one pallas_call (4 inputs, 1 output)
# ----------------------------------------------------------------------------
@jax.jit
def custom_network_forward(images_nchw, params):
    n, c, hh, ww = images_nchw.shape
    hw = hh * ww

    # NCHW -> (N*H*W, C): channels on the lane axis for the conv matmul.
    # TODO(synk): at real encoder resolutions, take NHWC input directly (or do
    # this transpose inside the kernel) to avoid an extra HBM round trip.
    x2d = jnp.transpose(images_nchw, (0, 2, 3, 1)).reshape(n * hw, c)
    # bias column = 1.0 (matches the bias row folded into wc); rest zero-pad.
    x2d = jnp.concatenate(
        [x2d,
         jnp.ones((n * hw, 1), x2d.dtype),
         jnp.zeros((n * hw, C_PAD - c - 1), x2d.dtype)],
        axis=-1).astype(jnp.bfloat16)

    flops = 2 * (n * hw * C_PAD * EMB_SIZE          # conv matmul
                 + n * (n * hw) * EMB_SIZE          # pooling matmul
                 + n * EMB_SIZE * PAD_TO)           # packed head matmul
    bytes_accessed = (x2d.size * x2d.dtype.itemsize
                      + params["wc"].size * params["wc"].dtype.itemsize
                      + params["w_emb"].size * params["w_emb"].dtype.itemsize
                      + params["slab"].size * params["slab"].dtype.itemsize
                      + n * OUT_LANES * 4)

    out = pl.pallas_call(
        fused_kernel,
        out_shape=jax.ShapeDtypeStruct((n, OUT_LANES), jnp.float32),
        cost_estimate=pl.CostEstimate(flops=flops, transcendentals=0,
                                      bytes_accessed=bytes_accessed),
        # No grid: the whole working set is « 1 MiB, single VMEM-resident
        # block (default BlockSpecs). When the real encoder / batch arrives,
        # add a row grid (N*HW for conv/pool, N for heads) with
        # compiler_params=pltpu.CompilerParams(dimension_semantics=("parallel",))
        # so v7x's 2 TensorCores are used, and size tiles against v7x's 64 MiB
        # VMEM (vmem_limit_bytes) rather than v5e/v6e's 128 MiB.
    )(x2d, params["wc"], params["w_emb"], params["slab"])

    # static, contiguous, 128-aligned slices (no scatter, no lane shuffles)
    logits = out[:, :ALL_LABELS]
    emb = out[:, PAD_TO:PAD_TO + EMB_SIZE]
    return logits, emb


# ----------------------------------------------------------------------------
# Pure-JAX reference (original module math, f32 HIGHEST) for correctness check
# ----------------------------------------------------------------------------
@jax.jit
def reference_forward(images_nchw, raw):
    hi = jax.lax.Precision.HIGHEST
    n, c, hh, ww = images_nchw.shape
    hw = hh * ww
    x2d = jnp.transpose(images_nchw, (0, 2, 3, 1)).reshape(n * hw, c)
    h = jnp.maximum(jnp.dot(x2d, raw["conv_w"], precision=hi) + raw["conv_b"], 0.0)
    emb = h.reshape(n, hw, EMB_SIZE).mean(axis=1)
    x1 = jnp.maximum(jnp.dot(emb, raw["w1"], precision=hi) + raw["b1"], 0.0)
    x2 = jnp.maximum(jnp.dot(jnp.concatenate([emb, x1], -1), raw["w2"],
                             precision=hi) + raw["b2"], 0.0)
    x3 = jnp.maximum(jnp.dot(jnp.concatenate([emb, x2], -1), raw["w3"],
                             precision=hi) + raw["b3"], 0.0)
    x4 = jnp.dot(jnp.concatenate([emb, x3], -1), raw["w4"],
                 precision=hi) + raw["b4"]
    logits = jnp.concatenate([x1, x2, x3[:, DUMMY:], x4[:, DUMMY:]], axis=-1)
    return logits, emb


# ----------------------------------------------------------------------------
# Deterministic parameter initialization (PyTorch Linear-style uniform bounds)
# ----------------------------------------------------------------------------
def make_params(key):
    def linear(k, fan_in, fan_out):
        kw, kb = jax.random.split(k)
        bound = 1.0 / np.sqrt(fan_in)
        w = jax.random.uniform(kw, (fan_in, fan_out), jnp.float32, -bound, bound)
        b = jax.random.uniform(kb, (fan_out,), jnp.float32, -bound, bound)
        return np.asarray(w), np.asarray(b)

    keys = jax.random.split(key, 5)
    conv_w, conv_b = linear(keys[0], IN_CHANNELS, EMB_SIZE)    # encoder stand-in
    w1, b1 = linear(keys[1], EMB_SIZE, L1_SIZE)
    w2, b2 = linear(keys[2], EMB_SIZE + L1_SIZE, L2_SIZE)
    w3, b3 = linear(keys[3], EMB_SIZE + L2_SIZE, L3_SIZE)
    w4, b4 = linear(keys[4], EMB_SIZE + L3_SIZE, L4_SIZE)

    # (1) conv weight with bias folded into row IN_CHANNELS (x2d bias col = 1.0)
    wc = np.zeros((C_PAD, EMB_SIZE), np.float32)
    wc[:IN_CHANNELS] = conv_w
    wc[IN_CHANNELS] = conv_b

    # (2) all emb-side head weights, packed at FINAL logits lane offsets
    #     (dummy columns routed to lanes 40 / 41)
    w_emb = np.zeros((EMB_SIZE, PAD_TO), np.float32)
    w_emb[:, L1_LO:L1_HI] = w1
    w_emb[:, L2_LO:L2_HI] = w2[:EMB_SIZE]
    w_emb[:, L3_LO:L3_HI] = w3[:EMB_SIZE, DUMMY:]
    w_emb[:, L4_LO:L4_HI] = w4[:EMB_SIZE, DUMMY:]
    if DUMMY:
        w_emb[:, DUMMY3_LANE] = w3[:EMB_SIZE, 0]
        w_emb[:, DUMMY4_LANE] = w4[:EMB_SIZE, 0]

    # (3) small slab: packed biases + chained correction weights
    #     rows act on the previous level's output (exact split of
    #     cat([emb, x_k]) @ W into emb @ W_a + x_k @ W_b).
    w2b, w3b, w4b = w2[EMB_SIZE:], w3[EMB_SIZE:], w4[EMB_SIZE:]
    slab = np.zeros((SLAB_ROWS, PAD_TO), np.float32)
    slab[ROW_BIAS, L1_LO:L1_HI] = b1
    slab[ROW_BIAS, L2_LO:L2_HI] = b2
    slab[ROW_BIAS, L3_LO:L3_HI] = b3[DUMMY:]
    slab[ROW_BIAS, L4_LO:L4_HI] = b4[DUMMY:]
    slab[ROW_W2B:ROW_W2B + L1_SIZE, L2_LO:L2_HI] = w2b
    slab[ROW_W3B:ROW_W3B + L2_SIZE, L3_LO:L3_HI] = w3b[:, DUMMY:]
    slab[ROW_W4B:ROW_W4B + L3_SIZE, L4_LO:L4_HI] = w4b[:, DUMMY:]
    if DUMMY:
        slab[ROW_BIAS, DUMMY3_LANE] = b3[0]
        slab[ROW_BIAS, DUMMY4_LANE] = b4[0]
        slab[ROW_W3B:ROW_W3B + L2_SIZE, DUMMY3_LANE] = w3b[:, 0]
        slab[ROW_W4B:ROW_W4B + L3_SIZE, DUMMY4_LANE] = w4b[:, 0]

    params = {
        "wc": jnp.asarray(wc, jnp.bfloat16),        # (8, 384)   MXU operand
        "w_emb": jnp.asarray(w_emb, jnp.bfloat16),  # (384, 128) MXU operand
        "slab": jnp.asarray(slab, jnp.float32),     # (32, 128)  VPU operand
    }
    raw = {
        "conv_w": jnp.asarray(conv_w), "conv_b": jnp.asarray(conv_b),
        "w1": jnp.asarray(w1), "b1": jnp.asarray(b1),
        "w2": jnp.asarray(w2), "b2": jnp.asarray(b2),
        "w3": jnp.asarray(w3), "b3": jnp.asarray(b3),
        "w4": jnp.asarray(w4), "b4": jnp.asarray(b4),
    }
    return params, raw


if __name__ == "__main__":
    key = jax.random.PRNGKey(0)
    k_img, k_par = jax.random.split(key)

    images = jax.random.normal(k_img, (BATCH, IN_CHANNELS, H, W), jnp.float32)
    params, raw = make_params(k_par)

    logits, embeddings = custom_network_forward(images, params)
    jax.block_until_ready((logits, embeddings))

    assert logits.shape == (BATCH, ALL_LABELS)
    assert embeddings.shape == (BATCH, EMB_SIZE)
    assert bool(jnp.all(jnp.isfinite(logits)))

    # Kernel MXU matmuls use bf16 inputs (f32 accumulation); reference is f32
    # HIGHEST, so the tolerance is intentionally at 2e-2.
    ref_logits, ref_emb = reference_forward(images, raw)
    np.testing.assert_allclose(np.asarray(logits), np.asarray(ref_logits),
                               rtol=2e-2, atol=2e-2)
    np.testing.assert_allclose(np.asarray(embeddings), np.asarray(ref_emb),
                               rtol=2e-2, atol=2e-2)

    print("KERNEL_OK")
</pallas_src>

<mosaic_0001>
module attributes {stable_mosaic.version = 11 : i64} {
  func.func @fused_kernel(%arg0: memref<512x8xbf16, #tpu.memory_space<vmem>>, %arg1: memref<8x384xbf16, #tpu.memory_space<vmem>>, %arg2: memref<384x128xbf16, #tpu.memory_space<vmem>>, %arg3: memref<32x128xf32, #tpu.memory_space<vmem>>, %arg4: memref<2x512xf32, #tpu.memory_space<vmem>>) attributes {dimension_semantics = [], scalar_prefetch = 0 : i64, scratch_operands = 0 : i64, tpu.core_type = #tpu.core_type<tc>} {
    %c0 = arith.constant 0 : index
    %c0_0 = arith.constant 0 : index
    %0 = vector.load %arg0[%c0, %c0_0] : memref<512x8xbf16, #tpu.memory_space<vmem>>, vector<512x8xbf16>
    %c0_1 = arith.constant 0 : index
    %c0_2 = arith.constant 0 : index
    %1 = vector.load %arg1[%c0_1, %c0_2] : memref<8x384xbf16, #tpu.memory_space<vmem>>, vector<8x384xbf16>
    %cst = arith.constant dense<0.000000e+00> : vector<512x384xf32>
    %2 = tpu.matmul %0, %1, %cst {dimension_numbers = #tpu.dot_dimension_numbers<[1], [0], [0], [1], [0, 0, 1, 1], [], []>} : vector<512x8xbf16>, vector<8x384xbf16>, vector<512x384xf32> -> vector<512x384xf32>
    %cst_3 = arith.constant 0.000000e+00 : f32
    %3 = vector.broadcast %cst_3 : f32 to vector<512x384xf32>
    %4 = arith.maximumf %2, %3 : vector<512x384xf32>
    %5 = arith.truncf %4 : vector<512x384xf32> to vector<512x384xbf16>
    %6 = tpu.iota {dimensions = array<i32: 0>} : vector<2x512xi32>
    %7 = tpu.iota {dimensions = array<i32: 1>} : vector<2x512xi32>
    %c256_i32 = arith.constant 256 : i32
    %8 = vector.broadcast %c256_i32 : i32 to vector<2x512xi32>
    %9 = arith.muli %6, %8 : vector<2x512xi32>
    %10 = arith.cmpi sge, %7, %9 : vector<2x512xi32>
    %c1_i32 = arith.constant 1 : i32
    %11 = vector.broadcast %c1_i32 : i32 to vector<2x512xi32>
    %12 = arith.addi %6, %11 : vector<2x512xi32>
    %c256_i32_4 = arith.constant 256 : i32
    %13 = vector.broadcast %c256_i32_4 : i32 to vector<2x512xi32>
    %14 = arith.muli %12, %13 : vector<2x512xi32>
    %15 = arith.cmpi slt, %7, %14 : vector<2x512xi32>
    %16 = arith.andi %10, %15 : vector<2x512xi1>
    %cst_5 = arith.constant 3.906250e-03 : f32
    %cst_6 = arith.constant 0.000000e+00 : f32
    %17 = vector.broadcast %cst_5 : f32 to vector<2x512xf32>
    %18 = vector.broadcast %cst_6 : f32 to vector<2x512xf32>
    %19 = arith.select %16, %17, %18 : vector<2x512xi1>, vector<2x512xf32>
    %20 = arith.truncf %19 : vector<2x512xf32> to vector<2x512xbf16>
    %cst_7 = arith.constant dense<0.000000e+00> : vector<2x384xf32>
    %21 = tpu.matmul %20, %5, %cst_7 {dimension_numbers = #tpu.dot_dimension_numbers<[1], [0], [0], [1], [0, 0, 1, 1], [], []>} : vector<2x512xbf16>, vector<512x384xbf16>, vector<2x384xf32> -> vector<2x384xf32>
    %c0_8 = arith.constant 0 : index
    %c0_9 = arith.constant 0 : index
    %22 = vector.load %arg3[%c0_8, %c0_9] : memref<32x128xf32, #tpu.memory_space<vmem>>, vector<32x128xf32>
    %23 = arith.truncf %21 : vector<2x384xf32> to vector<2x384xbf16>
    %c0_10 = arith.constant 0 : index
    %c0_11 = arith.constant 0 : index
    %24 = vector.load %arg2[%c0_10, %c0_11] : memref<384x128xbf16, #tpu.memory_space<vmem>>, vector<384x128xbf16>
    %cst_12 = arith.constant dense<0.000000e+00> : vector<2x128xf32>
    %25 = tpu.matmul %23, %24, %cst_12 {dimension_numbers = #tpu.dot_dimension_numbers<[1], [0], [0], [1], [0, 0, 1, 1], [], []>} : vector<2x384xbf16>, vector<384x128xbf16>, vector<2x128xf32> -> vector<2x128xf32>
    %26 = vector.extract_strided_slice %22 {offsets = [0, 0], sizes = [1, 128], strides = [1, 1]} : vector<32x128xf32> to vector<1x128xf32>
    %27 = vector.broadcast %26 : vector<1x128xf32> to vector<2x128xf32>
    %28 = arith.addf %25, %27 : vector<2x128xf32>
    %29 = tpu.iota {dimensions = array<i32: 1>} : vector<2x128xi32>
    %c4_i32 = arith.constant 4 : i32
    %30 = vector.broadcast %c4_i32 : i32 to vector<2x128xi32>
    %31 = arith.cmpi slt, %29, %30 : vector<2x128xi32>
    %c4_i32_13 = arith.constant 4 : i32
    %32 = vector.broadcast %c4_i32_13 : i32 to vector<2x128xi32>
    %33 = arith.cmpi sge, %29, %32 : vector<2x128xi32>
    %c12_i32 = arith.constant 12 : i32
    %34 = vector.broadcast %c12_i32 : i32 to vector<2x128xi32>
    %35 = arith.cmpi slt, %29, %34 : vector<2x128xi32>
    %36 = arith.andi %33, %35 : vector<2x128xi1>
    %c12_i32_14 = arith.constant 12 : i32
    %37 = vector.broadcast %c12_i32_14 : i32 to vector<2x128xi32>
    %38 = arith.cmpi sge, %29, %37 : vector<2x128xi32>
    %c24_i32 = arith.constant 24 : i32
    %39 = vector.broadcast %c24_i32 : i32 to vector<2x128xi32>
    %40 = arith.cmpi slt, %29, %39 : vector<2x128xi32>
    %41 = arith.andi %38, %40 : vector<2x128xi1>
    %c40_i32 = arith.constant 40 : i32
    %42 = vector.broadcast %c40_i32 : i32 to vector<2x128xi32>
    %43 = arith.cmpi eq, %29, %42 : vector<2x128xi32>
    %44 = arith.ori %41, %43 : vector<2x128xi1>
    %cst_15 = arith.constant 0.000000e+00 : f32
    %45 = vector.broadcast %cst_15 : f32 to vector<2x128xf32>
    %46 = arith.maximumf %28, %45 : vector<2x128xf32>
    %47 = arith.select %31, %46, %28 : vector<2x128xi1>, vector<2x128xf32>
    %48 = vector.extract_strided_slice %47 {offsets = [0, 0], sizes = [2, 1], strides = [1, 1]} : vector<2x128xf32> to vector<2x1xf32>
    %49 = vector.extract_strided_slice %22 {offsets = [1, 0], sizes = [1, 128], strides = [1, 1]} : vector<32x128xf32> to vector<1x128xf32>
    %50 = vector.broadcast %48 : vector<2x1xf32> to vector<2x128xf32>
    %51 = vector.broadcast %49 : vector<1x128xf32> to vector<2x128xf32>
    %52 = arith.mulf %50, %51 : vector<2x128xf32>
    %53 = vector.extract_strided_slice %47 {offsets = [0, 1], sizes = [2, 1], strides = [1, 1]} : vector<2x128xf32> to vector<2x1xf32>
    %54 = vector.extract_strided_slice %22 {offsets = [2, 0], sizes = [1, 128], strides = [1, 1]} : vector<32x128xf32> to vector<1x128xf32>
    %55 = vector.broadcast %53 : vector<2x1xf32> to vector<2x128xf32>
    %56 = vector.broadcast %54 : vector<1x128xf32> to vector<2x128xf32>
    %57 = arith.mulf %55, %56 : vector<2x128xf32>
    %58 = arith.addf %52, %57 : vector<2x128xf32>
    %59 = vector.extract_strided_slice %47 {offsets = [0, 2], sizes = [2, 1], strides = [1, 1]} : vector<2x128xf32> to vector<2x1xf32>
    %60 = vector.extract_strided_slice %22 {offsets = [3, 0], sizes = [1, 128], strides = [1, 1]} : vector<32x128xf32> to vector<1x128xf32>
    %61 = vector.broadcast %59 : vector<2x1xf32> to vector<2x128xf32>
    %62 = vector.broadcast %60 : vector<1x128xf32> to vector<2x128xf32>
    %63 = arith.mulf %61, %62 : vector<2x128xf32>
    %64 = arith.addf %58, %63 : vector<2x128xf32>
    %65 = vector.extract_strided_slice %47 {offsets = [0, 3], sizes = [2, 1], strides = [1, 1]} : vector<2x128xf32> to vector<2x1xf32>
    %66 = vector.extract_strided_slice %22 {offsets = [4, 0], sizes = [1, 128], strides = [1, 1]} : vector<32x128xf32> to vector<1x128xf32>
    %67 = vector.broadcast %65 : vector<2x1xf32> to vector<2x128xf32>
    %68 = vector.broadcast %66 : vector<1x128xf32> to vector<2x128xf32>
    %69 = arith.mulf %67, %68 : vector<2x128xf32>
    %70 = arith.addf %64, %69 : vector<2x128xf32>
    %71 = arith.addf %47, %70 : vector<2x128xf32>
    %cst_16 = arith.constant 0.000000e+00 : f32
    %72 = vector.broadcast %cst_16 : f32 to vector<2x128xf32>
    %73 = arith.maximumf %71, %72 : vector<2x128xf32>
    %74 = arith.select %36, %73, %71 : vector<2x128xi1>, vector<2x128xf32>
    %75 = vector.extract_strided_slice %74 {offsets = [0, 4], sizes = [2, 1], strides = [1, 1]} : vector<2x128xf32> to vector<2x1xf32>
    %76 = vector.extract_strided_slice %22 {offsets = [5, 0], sizes = [1, 128], strides = [1, 1]} : vector<32x128xf32> to vector<1x128xf32>
    %77 = vector.broadcast %75 : vector<2x1xf32> to vector<2x128xf32>
    %78 = vector.broadcast %76 : vector<1x128xf32> to vector<2x128xf32>
    %79 = arith.mulf %77, %78 : vector<2x128xf32>
    %80 = vector.extract_strided_slice %74 {offsets = [0, 5], sizes = [2, 1], strides = [1, 1]} : vector<2x128xf32> to vector<2x1xf32>
    %81 = vector.extract_strided_slice %22 {offsets = [6, 0], sizes = [1, 128], strides = [1, 1]} : vector<32x128xf32> to vector<1x128xf32>
    %82 = vector.broadcast %80 : vector<2x1xf32> to vector<2x128xf32>
    %83 = vector.broadcast %81 : vector<1x128xf32> to vector<2x128xf32>
    %84 = arith.mulf %82, %83 : vector<2x128xf32>
    %85 = arith.addf %79, %84 : vector<2x128xf32>
    %86 = vector.extract_strided_slice %74 {offsets = [0, 6], sizes = [2, 1], strides = [1, 1]} : vector<2x128xf32> to vector<2x1xf32>
    %87 = vector.extract_strided_slice %22 {offsets = [7, 0], sizes = [1, 128], strides = [1, 1]} : vector<32x128xf32> to vector<1x128xf32>
    %88 = vector.broadcast %86 : vector<2x1xf32> to vector<2x128xf32>
    %89 = vector.broadcast %87 : vector<1x128xf32> to vector<2x128xf32>
    %90 = arith.mulf %88, %89 : vector<2x128xf32>
    %91 = arith.addf %85, %90 : vector<2x128xf32>
    %92 = vector.extract_strided_slice %74 {offsets = [0, 7], sizes = [2, 1], strides = [1, 1]} : vector<2x128xf32> to vector<2x1xf32>
    %93 = vector.extract_strided_slice %22 {offsets = [8, 0], sizes = [1, 128], strides = [1, 1]} : vector<32x128xf32> to vector<1x128xf32>
    %94 = vector.broadcast %92 : vector<2x1xf32> to vector<2x128xf32>
    %95 = vector.broadcast %93 : vector<1x128xf32> to vector<2x128xf32>
    %96 = arith.mulf %94, %95 : vector<2x128xf32>
    %97 = arith.addf %91, %96 : vector<2x128xf32>
    %98 = vector.extract_strided_slice %74 {offsets = [0, 8], sizes = [2, 1], strides = [1, 1]} : vector<2x128xf32> to vector<2x1xf32>
    %99 = vector.extract_strided_slice %22 {offsets = [9, 0], sizes = [1, 128], strides = [1, 1]} : vector<32x128xf32> to vector<1x128xf32>
    %100 = vector.broadcast %98 : vector<2x1xf32> to vector<2x128xf32>
    %101 = vector.broadcast %99 : vector<1x128xf32> to vector<2x128xf32>
    %102 = arith.mulf %100, %101 : vector<2x128xf32>
    %103 = arith.addf %97, %102 : vector<2x128xf32>
    %104 = vector.extract_strided_slice %74 {offsets = [0, 9], sizes = [2, 1], strides = [1, 1]} : vector<2x128xf32> to vector<2x1xf32>
    %105 = vector.extract_strided_slice %22 {offsets = [10, 0], sizes = [1, 128], strides = [1, 1]} : vector<32x128xf32> to vector<1x128xf32>
    %106 = vector.broadcast %104 : vector<2x1xf32> to vector<2x128xf32>
    %107 = vector.broadcast %105 : vector<1x128xf32> to vector<2x128xf32>
    %108 = arith.mulf %106, %107 : vector<2x128xf32>
    %109 = arith.addf %103, %108 : vector<2x128xf32>
    %110 = vector.extract_strided_slice %74 {offsets = [0, 10], sizes = [2, 1], strides = [1, 1]} : vector<2x128xf32> to vector<2x1xf32>
    %111 = vector.extract_strided_slice %22 {offsets = [11, 0], sizes = [1, 128], strides = [1, 1]} : vector<32x128xf32> to vector<1x128xf32>
    %112 = vector.broadcast %110 : vector<2x1xf32> to vector<2x128xf32>
    %113 = vector.broadcast %111 : vector<1x128xf32> to vector<2x128xf32>
    %114 = arith.mulf %112, %113 : vector<2x128xf32>
    %115 = arith.addf %109, %114 : vector<2x128xf32>
    %116 = vector.extract_strided_slice %74 {offsets = [0, 11], sizes = [2, 1], strides = [1, 1]} : vector<2x128xf32> to vector<2x1xf32>
    %117 = vector.extract_strided_slice %22 {offsets = [12, 0], sizes = [1, 128], strides = [1, 1]} : vector<32x128xf32> to vector<1x128xf32>
    %118 = vector.broadcast %116 : vector<2x1xf32> to vector<2x128xf32>
    %119 = vector.broadcast %117 : vector<1x128xf32> to vector<2x128xf32>
    %120 = arith.mulf %118, %119 : vector<2x128xf32>
    %121 = arith.addf %115, %120 : vector<2x128xf32>
    %122 = arith.addf %74, %121 : vector<2x128xf32>
    %cst_17 = arith.constant 0.000000e+00 : f32
    %123 = vector.broadcast %cst_17 : f32 to vector<2x128xf32>
    %124 = arith.maximumf %122, %123 : vector<2x128xf32>
    %125 = arith.select %44, %124, %122 : vector<2x128xi1>, vector<2x128xf32>
    %126 = vector.extract_strided_slice %125 {offsets = [0, 40], sizes = [2, 1], strides = [1, 1]} : vector<2x128xf32> to vector<2x1xf32>
    %127 = vector.extract_strided_slice %22 {offsets = [13, 0], sizes = [1, 128], strides = [1, 1]} : vector<32x128xf32> to vector<1x128xf32>
    %128 = vector.broadcast %126 : vector<2x1xf32> to vector<2x128xf32>
    %129 = vector.broadcast %127 : vector<1x128xf32> to vector<2x128xf32>
    %130 = arith.mulf %128, %129 : vector<2x128xf32>
    %131 = vector.extract_strided_slice %125 {offsets = [0, 12], sizes = [2, 1], strides = [1, 1]} : vector<2x128xf32> to vector<2x1xf32>
    %132 = vector.extract_strided_slice %22 {offsets = [14, 0], sizes = [1, 128], strides = [1, 1]} : vector<32x128xf32> to vector<1x128xf32>
    %133 = vector.broadcast %131 : vector<2x1xf32> to vector<2x128xf32>
    %134 = vector.broadcast %132 : vector<1x128xf32> to vector<2x128xf32>
    %135 = arith.mulf %133, %134 : vector<2x128xf32>
    %136 = arith.addf %130, %135 : vector<2x128xf32>
    %137 = vector.extract_strided_slice %125 {offsets = [0, 13], sizes = [2, 1], strides = [1, 1]} : vector<2x128xf32> to vector<2x1xf32>
    %138 = vector.extract_strided_slice %22 {offsets = [15, 0], sizes = [1, 128], strides = [1, 1]} : vector<32x128xf32> to vector<1x128xf32>
    %139 = vector.broadcast %137 : vector<2x1xf32> to vector<2x128xf32>
    %140 = vector.broadcast %138 : vector<1x128xf32> to vector<2x128xf32>
    %141 = arith.mulf %139, %140 : vector<2x128xf32>
    %142 = arith.addf %136, %141 : vector<2x128xf32>
    %143 = vector.extract_strided_slice %125 {offsets = [0, 14], sizes = [2, 1], strides = [1, 1]} : vector<2x128xf32> to vector<2x1xf32>
    %144 = vector.extract_strided_slice %22 {offsets = [16, 0], sizes = [1, 128], strides = [1, 1]} : vector<32x128xf32> to vector<1x128xf32>
    %145 = vector.broadcast %143 : vector<2x1xf32> to vector<2x128xf32>
    %146 = vector.broadcast %144 : vector<1x128xf32> to vector<2x128xf32>
    %147 = arith.mulf %145, %146 : vector<2x128xf32>
    %148 = arith.addf %142, %147 : vector<2x128xf32>
    %149 = vector.extract_strided_slice %125 {offsets = [0, 15], sizes = [2, 1], strides = [1, 1]} : vector<2x128xf32> to vector<2x1xf32>
    %150 = vector.extract_strided_slice %22 {offsets = [17, 0], sizes = [1, 128], strides = [1, 1]} : vector<32x128xf32> to vector<1x128xf32>
    %151 = vector.broadcast %149 : vector<2x1xf32> to vector<2x128xf32>
    %152 = vector.broadcast %150 : vector<1x128xf32> to vector<2x128xf32>
    %153 = arith.mulf %151, %152 : vector<2x128xf32>
    %154 = arith.addf %148, %153 : vector<2x128xf32>
    %155 = vector.extract_strided_slice %125 {offsets = [0, 16], sizes = [2, 1], strides = [1, 1]} : vector<2x128xf32> to vector<2x1xf32>
    %156 = vector.extract_strided_slice %22 {offsets = [18, 0], sizes = [1, 128], strides = [1, 1]} : vector<32x128xf32> to vector<1x128xf32>
    %157 = vector.broadcast %155 : vector<2x1xf32> to vector<2x128xf32>
    %158 = vector.broadcast %156 : vector<1x128xf32> to vector<2x128xf32>
    %159 = arith.mulf %157, %158 : vector<2x128xf32>
    %160 = arith.addf %154, %159 : vector<2x128xf32>
    %161 = vector.extract_strided_slice %125 {offsets = [0, 17], sizes = [2, 1], strides = [1, 1]} : vector<2x128xf32> to vector<2x1xf32>
    %162 = vector.extract_strided_slice %22 {offsets = [19, 0], sizes = [1, 128], strides = [1, 1]} : vector<32x128xf32> to vector<1x128xf32>
    %163 = vector.broadcast %161 : vector<2x1xf32> to vector<2x128xf32>
    %164 = vector.broadcast %162 : vector<1x128xf32> to vector<2x128xf32>
    %165 = arith.mulf %163, %164 : vector<2x128xf32>
    %166 = arith.addf %160, %165 : vector<2x128xf32>
    %167 = vector.extract_strided_slice %125 {offsets = [0, 18], sizes = [2, 1], strides = [1, 1]} : vector<2x128xf32> to vector<2x1xf32>
    %168 = vector.extract_strided_slice %22 {offsets = [20, 0], sizes = [1, 128], strides = [1, 1]} : vector<32x128xf32> to vector<1x128xf32>
    %169 = vector.broadcast %167 : vector<2x1xf32> to vector<2x128xf32>
    %170 = vector.broadcast %168 : vector<1x128xf32> to vector<2x128xf32>
    %171 = arith.mulf %169, %170 : vector<2x128xf32>
    %172 = arith.addf %166, %171 : vector<2x128xf32>
    %173 = vector.extract_strided_slice %125 {offsets = [0, 19], sizes = [2, 1], strides = [1, 1]} : vector<2x128xf32> to vector<2x1xf32>
    %174 = vector.extract_strided_slice %22 {offsets = [21, 0], sizes = [1, 128], strides = [1, 1]} : vector<32x128xf32> to vector<1x128xf32>
    %175 = vector.broadcast %173 : vector<2x1xf32> to vector<2x128xf32>
    %176 = vector.broadcast %174 : vector<1x128xf32> to vector<2x128xf32>
    %177 = arith.mulf %175, %176 : vector<2x128xf32>
    %178 = arith.addf %172, %177 : vector<2x128xf32>
    %179 = vector.extract_strided_slice %125 {offsets = [0, 20], sizes = [2, 1], strides = [1, 1]} : vector<2x128xf32> to vector<2x1xf32>
    %180 = vector.extract_strided_slice %22 {offsets = [22, 0], sizes = [1, 128], strides = [1, 1]} : vector<32x128xf32> to vector<1x128xf32>
    %181 = vector.broadcast %179 : vector<2x1xf32> to vector<2x128xf32>
    %182 = vector.broadcast %180 : vector<1x128xf32> to vector<2x128xf32>
    %183 = arith.mulf %181, %182 : vector<2x128xf32>
    %184 = arith.addf %178, %183 : vector<2x128xf32>
    %185 = vector.extract_strided_slice %125 {offsets = [0, 21], sizes = [2, 1], strides = [1, 1]} : vector<2x128xf32> to vector<2x1xf32>
    %186 = vector.extract_strided_slice %22 {offsets = [23, 0], sizes = [1, 128], strides = [1, 1]} : vector<32x128xf32> to vector<1x128xf32>
    %187 = vector.broadcast %185 : vector<2x1xf32> to vector<2x128xf32>
    %188 = vector.broadcast %186 : vector<1x128xf32> to vector<2x128xf32>
    %189 = arith.mulf %187, %188 : vector<2x128xf32>
    %190 = arith.addf %184, %189 : vector<2x128xf32>
    %191 = vector.extract_strided_slice %125 {offsets = [0, 22], sizes = [2, 1], strides = [1, 1]} : vector<2x128xf32> to vector<2x1xf32>
    %192 = vector.extract_strided_slice %22 {offsets = [24, 0], sizes = [1, 128], strides = [1, 1]} : vector<32x128xf32> to vector<1x128xf32>
    %193 = vector.broadcast %191 : vector<2x1xf32> to vector<2x128xf32>
    %194 = vector.broadcast %192 : vector<1x128xf32> to vector<2x128xf32>
    %195 = arith.mulf %193, %194 : vector<2x128xf32>
    %196 = arith.addf %190, %195 : vector<2x128xf32>
    %197 = vector.extract_strided_slice %125 {offsets = [0, 23], sizes = [2, 1], strides = [1, 1]} : vector<2x128xf32> to vector<2x1xf32>
    %198 = vector.extract_strided_slice %22 {offsets = [25, 0], sizes = [1, 128], strides = [1, 1]} : vector<32x128xf32> to vector<1x128xf32>
    %199 = vector.broadcast %197 : vector<2x1xf32> to vector<2x128xf32>
    %200 = vector.broadcast %198 : vector<1x128xf32> to vector<2x128xf32>
    %201 = arith.mulf %199, %200 : vector<2x128xf32>
    %202 = arith.addf %196, %201 : vector<2x128xf32>
    %203 = arith.addf %125, %202 : vector<2x128xf32>
    %c0_18 = arith.constant 0 : index
    %c0_19 = arith.constant 0 : index
    %204 = vector.load %arg4[%c0_18, %c0_19] : memref<2x512xf32, #tpu.memory_space<vmem>>, vector<2x128xf32>
    tpu.vector_store %arg4[%c0_18, %c0_19], %203 {strides = array<i32>} : memref<2x512xf32, #tpu.memory_space<vmem>>, vector<2x128xf32>,
    %c0_20 = arith.constant 0 : index
    %c128 = arith.constant 128 : index
    %205 = vector.load %arg4[%c0_20, %c128] : memref<2x512xf32, #tpu.memory_space<vmem>>, vector<2x384xf32>
    tpu.vector_store %arg4[%c0_20, %c128], %21 {strides = array<i32>} : memref<2x512xf32, #tpu.memory_space<vmem>>, vector<2x384xf32>,
    return
  }
}

</mosaic_0001>

<llo_original>
// kernel: custom_network_forward.1
$region0: #{custom_network_forward.1}
  #allocation0 [shape = 'u32[]', space=smem, size = 0x4, offset = 0x4, fixed_abs, tag = 'smem constant byte address 0x4 - core index']
  #allocation1 [shape = 'u32[144,128]{1,0:T(1,128)}', space=vmem, size = 0x12000, scoped, tag = 'internal scratch']
  %s0 = inlined_call_operand.vmem [shape: bf16[512,8], index: 0, kind: input, shape index: {}]
  %s1 = inlined_call_operand.vmem [shape: bf16[8,384], index: 1, kind: input, shape index: {}]
  %s2 = inlined_call_operand.vmem [shape: bf16[384,128], index: 2, kind: input, shape index: {}]
  %s3 = inlined_call_operand.vmem [shape: f32[32,128], index: 3, kind: input, shape index: {}]
  %s4 = inlined_call_operand.vmem [shape: f32[2,512], index: 4, kind: output, shape index: {}]
  %s5 = sld [smem:[#allocation0]]
  $region26: #{custom_network_forward.1} parent=0
    _
  %s7 = ssub.s32 1, %s5
  %s8 = scalar_select 0, %s7, %s5
  // Predicated region
  $region2: #{custom_network_forward.1} parent=0 // pred_check
    _
  $region3: #{custom_network_forward.1} parent=0 // pred_check_branch
    %10 = sbr.rel (0) target = $region5
  $region4: #{custom_network_forward.1} parent=0 // pred_region
    _
  $region5: #{custom_network_forward.1} parent=0 // pred_fallthru
    _
  // Predicated region
  $region6: #{custom_network_forward.1} parent=0 // pred_check
    _
  $region7: #{custom_network_forward.1} parent=0 // pred_check_branch
    %12 = sbr.rel (0) target = $region9
  $region8: #{custom_network_forward.1} parent=0 // pred_region
    _
  $region9: #{custom_network_forward.1} parent=0 // pred_fallthru
    _
  // Predicated region
  $region10: #{custom_network_forward.1} parent=0 // pred_check
    _
  $region11: #{custom_network_forward.1} parent=0 // pred_check_branch
    %14 = sbr.rel (0) target = $region13
  $region12: #{custom_network_forward.1} parent=0 // pred_region
    _
  $region13: #{custom_network_forward.1} parent=0 // pred_fallthru
    _
  // Predicated region
  $region14: #{custom_network_forward.1} parent=0 // pred_check
    _
  $region15: #{custom_network_forward.1} parent=0 // pred_check_branch
    %16 = sbr.rel (0) target = $region17
  $region16: #{custom_network_forward.1} parent=0 // pred_region
    _
  $region17: #{custom_network_forward.1} parent=0 // pred_fallthru
    _
  %v18 = vld [vmem:[%s0] sm:$0xf]
  %v19 = vld [vmem:[%s0 + $0x4] sm:$0xf]
  %v20 = vld [vmem:[%s0 + $0x8] sm:$0xf]
  %v21 = vld [vmem:[%s0 + $0xc] sm:$0xf]
  %v22 = vld [vmem:[%s0 + $0x10] sm:$0xf]
  %v23 = vld [vmem:[%s0 + $0x14] sm:$0xf]
  %v24 = vld [vmem:[%s0 + $0x18] sm:$0xf]
  %v25 = vld [vmem:[%s0 + $0x1c] sm:$0xf]
  %v26 = vld [vmem:[%s0 + $0x20] sm:$0xf]
  %v27 = vld [vmem:[%s0 + $0x24] sm:$0xf]
  %v28 = vld [vmem:[%s0 + $0x28] sm:$0xf]
  %v29 = vld [vmem:[%s0 + $0x2c] sm:$0xf]
  %v30 = vld [vmem:[%s0 + $0x30] sm:$0xf]
  %v31 = vld [vmem:[%s0 + $0x34] sm:$0xf]
  %v32 = vld [vmem:[%s0 + $0x38] sm:$0xf]
  %v33 = vld [vmem:[%s0 + $0x3c] sm:$0xf]
  %v34 = vld [vmem:[%s0 + $0x40] sm:$0xf]
  %v35 = vld [vmem:[%s0 + $0x44] sm:$0xf]
  %v36 = vld [vmem:[%s0 + $0x48] sm:$0xf]
  %v37 = vld [vmem:[%s0 + $0x4c] sm:$0xf]
  %v38 = vld [vmem:[%s0 + $0x50] sm:$0xf]
  %v39 = vld [vmem:[%s0 + $0x54] sm:$0xf]
  %v40 = vld [vmem:[%s0 + $0x58] sm:$0xf]
  %v41 = vld [vmem:[%s0 + $0x5c] sm:$0xf]
  %v42 = vld [vmem:[%s0 + $0x60] sm:$0xf]
  %v43 = vld [vmem:[%s0 + $0x64] sm:$0xf]
  %v44 = vld [vmem:[%s0 + $0x68] sm:$0xf]
  %v45 = vld [vmem:[%s0 + $0x6c] sm:$0xf]
  %v46 = vld [vmem:[%s0 + $0x70] sm:$0xf]
  %v47 = vld [vmem:[%s0 + $0x74] sm:$0xf]
  %v48 = vld [vmem:[%s0 + $0x78] sm:$0xf]
  %v49 = vld [vmem:[%s0 + $0x7c] sm:$0xf]
  %v50 = vld [vmem:[%s0 + $0x80] sm:$0xf]
  %v51 = vld [vmem:[%s0 + $0x84] sm:$0xf]
  %v52 = vld [vmem:[%s0 + $0x88] sm:$0xf]
  %v53 = vld [vmem:[%s0 + $0x8c] sm:$0xf]
  %v54 = vld [vmem:[%s0 + $0x90] sm:$0xf]
  %v55 = vld [vmem:[%s0 + $0x94] sm:$0xf]
  %v56 = vld [vmem:[%s0 + $0x98] sm:$0xf]
  %v57 = vld [vmem:[%s0 + $0x9c] sm:$0xf]
  %v58 = vld [vmem:[%s0 + $0xa0] sm:$0xf]
  %v59 = vld [vmem:[%s0 + $0xa4] sm:$0xf]
  %v60 = vld [vmem:[%s0 + $0xa8] sm:$0xf]
  %v61 = vld [vmem:[%s0 + $0xac] sm:$0xf]
  %v62 = vld [vmem:[%s0 + $0xb0] sm:$0xf]
  %v63 = vld [vmem:[%s0 + $0xb4] sm:$0xf]
  %v64 = vld [vmem:[%s0 + $0xb8] sm:$0xf]
  %v65 = vld [vmem:[%s0 + $0xbc] sm:$0xf]
  %v66 = vld [vmem:[%s0 + $0xc0] sm:$0xf]
  %v67 = vld [vmem:[%s0 + $0xc4] sm:$0xf]
  %v68 = vld [vmem:[%s0 + $0xc8] sm:$0xf]
  %v69 = vld [vmem:[%s0 + $0xcc] sm:$0xf]
  %v70 = vld [vmem:[%s0 + $0xd0] sm:$0xf]
  %v71 = vld [vmem:[%s0 + $0xd4] sm:$0xf]
  %v72 = vld [vmem:[%s0 + $0xd8] sm:$0xf]
  %v73 = vld [vmem:[%s0 + $0xdc] sm:$0xf]
  %v74 = vld [vmem:[%s0 + $0xe0] sm:$0xf]
  %v75 = vld [vmem:[%s0 + $0xe4] sm:$0xf]
  %v76 = vld [vmem:[%s0 + $0xe8] sm:$0xf]
  %v77 = vld [vmem:[%s0 + $0xec] sm:$0xf]
  %v78 = vld [vmem:[%s0 + $0xf0] sm:$0xf]
  %v79 = vld [vmem:[%s0 + $0xf4] sm:$0xf]
  %v80 = vld [vmem:[%s0 + $0xf8] sm:$0xf]
  %v81 = vld [vmem:[%s0 + $0xfc] sm:$0xf]
  %v82 = vld [vmem:[%s1] sm:$0xff]
  %v83 = vld [vmem:[%s1 + $0x8] sm:$0xf]
  %v148 = vunpack.c.l.b16 %v18
  %v149 = vunpack.c.l.b16 %v19
  %v150 = vunpack.c.l.b16 %v20
  %v151 = vunpack.c.l.b16 %v21
  %v152 = vunpack.c.l.b16 %v22
  %v153 = vunpack.c.l.b16 %v23
  %v154 = vunpack.c.l.b16 %v24
  %v155 = vunpack.c.l.b16 %v25
  %v156 = vunpack.c.l.b16 %v26
  %v157 = vunpack.c.l.b16 %v27
  %v158 = vunpack.c.l.b16 %v28
  %v159 = vunpack.c.l.b16 %v29
  %v160 = vunpack.c.l.b16 %v30
  %v161 = vunpack.c.l.b16 %v31
  %v162 = vunpack.c.l.b16 %v32
  %v163 = vunpack.c.l.b16 %v33
  %v164 = vunpack.c.l.b16 %v34
  %v165 = vunpack.c.l.b16 %v35
  %v166 = vunpack.c.l.b16 %v36
  %v167 = vunpack.c.l.b16 %v37
  %v168 = vunpack.c.l.b16 %v38
  %v169 = vunpack.c.l.b16 %v39
  %v170 = vunpack.c.l.b16 %v40
  %v171 = vunpack.c.l.b16 %v41
  %v172 = vunpack.c.l.b16 %v42
  %v173 = vunpack.c.l.b16 %v43
  %v174 = vunpack.c.l.b16 %v44
  %v175 = vunpack.c.l.b16 %v45
  %v176 = vunpack.c.l.b16 %v46
  %v177 = vunpack.c.l.b16 %v47
  %v178 = vunpack.c.l.b16 %v48
  %v179 = vunpack.c.l.b16 %v49
  %v180 = vunpack.c.l.b16 %v50
  %v181 = vunpack.c.l.b16 %v51
  %v182 = vunpack.c.l.b16 %v52
  %v183 = vunpack.c.l.b16 %v53
  %v184 = vunpack.c.l.b16 %v54
  %v185 = vunpack.c.l.b16 %v55
  %v186 = vunpack.c.l.b16 %v56
  %v187 = vunpack.c.l.b16 %v57
  %v188 = vunpack.c.l.b16 %v58
  %v189 = vunpack.c.l.b16 %v59
  %v190 = vunpack.c.l.b16 %v60
  %v191 = vunpack.c.l.b16 %v61
  %v192 = vunpack.c.l.b16 %v62
  %v193 = vunpack.c.l.b16 %v63
  %v194 = vunpack.c.l.b16 %v64
  %v195 = vunpack.c.l.b16 %v65
  %v196 = vunpack.c.l.b16 %v66
  %v197 = vunpack.c.l.b16 %v67
  %v198 = vunpack.c.l.b16 %v68
  %v199 = vunpack.c.l.b16 %v69
  %v200 = vunpack.c.l.b16 %v70
  %v201 = vunpack.c.l.b16 %v71
  %v202 = vunpack.c.l.b16 %v72
  %v203 = vunpack.c.l.b16 %v73
  %v204 = vunpack.c.l.b16 %v74
  %v205 = vunpack.c.l.b16 %v75
  %v206 = vunpack.c.l.b16 %v76
  %v207 = vunpack.c.l.b16 %v77
  %v208 = vunpack.c.l.b16 %v78
  %v209 = vunpack.c.l.b16 %v79
  %v210 = vunpack.c.l.b16 %v80
  %v211 = vunpack.c.l.b16 %v81
  %v212 = vpack.c.b16 %v149, %v148
  %v213 = vpack.c.b16 %v151, %v150
  %v214 = vpack.c.b16 %v153, %v152
  %v215 = vpack.c.b16 %v155, %v154
  %v216 = vpack.c.b16 %v157, %v156
  %v217 = vpack.c.b16 %v159, %v158
  %v218 = vpack.c.b16 %v161, %v160
  %v219 = vpack.c.b16 %v163, %v162
  %v220 = vpack.c.b16 %v165, %v164
  %v221 = vpack.c.b16 %v167, %v166
  %v222 = vpack.c.b16 %v169, %v168
  %v223 = vpack.c.b16 %v171, %v170
  %v224 = vpack.c.b16 %v173, %v172
  %v225 = vpack.c.b16 %v175, %v174
  %v226 = vpack.c.b16 %v177, %v176
  %v227 = vpack.c.b16 %v179, %v178
  %v228 = vpack.c.b16 %v181, %v180
  %v229 = vpack.c.b16 %v183, %v182
  %v230 = vpack.c.b16 %v185, %v184
  %v231 = vpack.c.b16 %v187, %v186
  %v232 = vpack.c.b16 %v189, %v188
  %v233 = vpack.c.b16 %v191, %v190
  %v234 = vpack.c.b16 %v193, %v192
  %v235 = vpack.c.b16 %v195, %v194
  %v236 = vpack.c.b16 %v197, %v196
  %v237 = vpack.c.b16 %v199, %v198
  %v238 = vpack.c.b16 %v201, %v200
  %v239 = vpack.c.b16 %v203, %v202
  %v240 = vpack.c.b16 %v205, %v204
  %v241 = vpack.c.b16 %v207, %v206
  %v242 = vpack.c.b16 %v209, %v208
  %v243 = vpack.c.b16 %v211, %v210
  %v246 = vunpack.c.l.b16 %v82
  %v247 = vunpack.c.h.b16 %v82
  %v248 = vunpack.c.l.b16 %v83
  %v249 = vpack.c.b16 %v246, %v246
  %v250 = vpack.c.b16 %v247, %v247
  %v251 = vpack.c.b16 %v248, %v248
  %vm252 = vcmask 64512
  %v254 = vsel %vm252, %v212, 0
  %v257 = vsel %vm252, %v213, 0
  %v260 = vsel %vm252, %v214, 0
  %v263 = vsel %vm252, %v215, 0
  %v266 = vsel %vm252, %v216, 0
  %v269 = vsel %vm252, %v217, 0
  %v272 = vsel %vm252, %v218, 0
  %v275 = vsel %vm252, %v219, 0
  %v278 = vsel %vm252, %v220, 0
  %v281 = vsel %vm252, %v221, 0
  %v284 = vsel %vm252, %v222, 0
  %v287 = vsel %vm252, %v223, 0
  %v290 = vsel %vm252, %v224, 0
  %v293 = vsel %vm252, %v225, 0
  %v296 = vsel %vm252, %v226, 0
  %v299 = vsel %vm252, %v227, 0
  %v302 = vsel %vm252, %v228, 0
  %v305 = vsel %vm252, %v229, 0
  %v308 = vsel %vm252, %v230, 0
  %v311 = vsel %vm252, %v231, 0
  %v314 = vsel %vm252, %v232, 0
  %v317 = vsel %vm252, %v233, 0
  %v320 = vsel %vm252, %v234, 0
  %v323 = vsel %vm252, %v235, 0
  %v326 = vsel %vm252, %v236, 0
  %v329 = vsel %vm252, %v237, 0
  %v332 = vsel %vm252, %v238, 0
  %v335 = vsel %vm252, %v239, 0
  %v338 = vsel %vm252, %v240, 0
  %v341 = vsel %vm252, %v241, 0
  %v344 = vsel %vm252, %v242, 0
  %v347 = vsel %vm252, %v243, 0
  %vm349 = vcmask 1043456
  %v351 = vsel %vm349, %v249, 0
  %v354 = vsel %vm349, %v250, 0
  %v357 = vsel %vm349, %v251, 0
  %359 = vmatprep.subr.bf16.mxu0 %v354
  %360 = vmatpush1.bf16.msra.mxu0 %v351
  %361 = vmatprep.subr.bf16.mxu0 0
  %362 = vmatpush1.bf16.msra.mxu0 0
  %363 = vmatprep.subr.bf16.mxu0 0
  %364 = vmatpush1.bf16.msra.mxu0 0
  %365 = vmatprep.subr.bf16.mxu0 0
  %366 = vmatpush1.bf16.msra.mxu0 0
  %367 = vmatprep.subr.bf16.mxu0 0
  %368 = vmatpush1.bf16.msra.mxu0 0
  %369 = vmatprep.subr.bf16.mxu0 0
  %370 = vmatpush1.bf16.msra.mxu0 0
  %371 = vmatprep.subr.bf16.mxu0 0
  %372 = vmatpush1.bf16.msra.mxu0 0
  %373 = vmatprep.subr.bf16.mxu0 0
  %374 = vmatpush1.bf16.msra.mxu0 0
  %375 = vmatprep.subr.bf16.mxu0 0
  %376 = vmatpush1.bf16.msra.mxu0 0
  %377 = vmatprep.subr.bf16.mxu0 0
  %378 = vmatpush1.bf16.msra.mxu0 0
  %379 = vmatprep.subr.bf16.mxu0 0
  %380 = vmatpush1.bf16.msra.mxu0 0
  %381 = vmatprep.subr.bf16.mxu0 0
  %382 = vmatpush1.bf16.msra.mxu0 0
  %383 = vmatprep.subr.bf16.mxu0 0
  %384 = vmatpush1.bf16.msra.mxu0 0
  %385 = vmatprep.subr.bf16.mxu0 0
  %386 = vmatpush1.bf16.msra.mxu0 0
  %387 = vmatprep.subr.bf16.mxu0 0
  %388 = vmatpush1.bf16.msra.mxu0 0
  %389 = vmatprep.subr.bf16.mxu0 0
  %390 = vmatpush1.bf16.msra.mxu0 0
  %391 = vmatprep.mubr.bf16.mxu0 0
  %392 = vmatmul.mubr.bf16.gmra.mrb[0].mxu0 %v254
  %v393 = vpop.f32.mrb[0].mxu0
  %v394 = vadd.f32 0.0, %v393
  %v395 = vpop.f32.mrb[0].mxu0
  %v396 = vadd.f32 0.0, %v395
  %v397 = vpop.f32.mrb[0].mxu0
  %v398 = vadd.f32 0.0, %v397
  %v399 = vpop.f32.mrb[0].mxu0
  %v400 = vadd.f32 0.0, %v399
  %401 = vmatprep.mubr.bf16.mxu0 0
  %402 = vmatmul.mubr.bf16.gmra.mrb[0].mxu0 %v257
  %v403 = vpop.f32.mrb[0].mxu0
  %v404 = vadd.f32 0.0, %v403
  %v405 = vpop.f32.mrb[0].mxu0
  %v406 = vadd.f32 0.0, %v405
  %v407 = vpop.f32.mrb[0].mxu0
  %v408 = vadd.f32 0.0, %v407
  %v409 = vpop.f32.mrb[0].mxu0
  %v410 = vadd.f32 0.0, %v409
  %411 = vmatprep.mubr.bf16.mxu0 0
  %412 = vmatmul.mubr.bf16.gmra.mrb[0].mxu0 %v260
  %v413 = vpop.f32.mrb[0].mxu0
  %v414 = vadd.f32 0.0, %v413
  %v415 = vpop.f32.mrb[0].mxu0
  %v416 = vadd.f32 0.0, %v415
  %v417 = vpop.f32.mrb[0].mxu0
  %v418 = vadd.f32 0.0, %v417
  %v419 = vpop.f32.mrb[0].mxu0
  %v420 = vadd.f32 0.0, %v419
  %421 = vmatprep.mubr.bf16.mxu0 0
  %422 = vmatmul.mubr.bf16.gmra.mrb[0].mxu0 %v263
  %v423 = vpop.f32.mrb[0].mxu0
  %v424 = vadd.f32 0.0, %v423
  %v425 = vpop.f32.mrb[0].mxu0
  %v426 = vadd.f32 0.0, %v425
  %v427 = vpop.f32.mrb[0].mxu0
  %v428 = vadd.f32 0.0, %v427
  %v429 = vpop.f32.mrb[0].mxu0
  %v430 = vadd.f32 0.0, %v429
  %431 = vmatprep.mubr.bf16.mxu0 0
  %432 = vmatmul.mubr.bf16.gmra.mrb[0].mxu0 %v266
  %v433 = vpop.f32.mrb[0].mxu0
  %v434 = vadd.f32 0.0, %v433
  %v435 = vpop.f32.mrb[0].mxu0
  %v436 = vadd.f32 0.0, %v435
  %v437 = vpop.f32.mrb[0].mxu0
  %v438 = vadd.f32 0.0, %v437
  %v439 = vpop.f32.mrb[0].mxu0
  %v440 = vadd.f32 0.0, %v439
  %441 = vmatprep.mubr.bf16.mxu0 0
  %442 = vmatmul.mubr.bf16.gmra.mrb[0].mxu0 %v269
  %v443 = vpop.f32.mrb[0].mxu0
  %v444 = vadd.f32 0.0, %v443
  %v445 = vpop.f32.mrb[0].mxu0
  %v446 = vadd.f32 0.0, %v445
  %v447 = vpop.f32.mrb[0].mxu0
  %v448 = vadd.f32 0.0, %v447
  %v449 = vpop.f32.mrb[0].mxu0
  %v450 = vadd.f32 0.0, %v449
  %451 = vmatprep.mubr.bf16.mxu0 0
  %452 = vmatmul.mubr.bf16.gmra.mrb[0].mxu0 %v272
  %v453 = vpop.f32.mrb[0].mxu0
  %v454 = vadd.f32 0.0, %v453
  %v455 = vpop.f32.mrb[0].mxu0
  %v456 = vadd.f32 0.0, %v455
  %v457 = vpop.f32.mrb[0].mxu0
  %v458 = vadd.f32 0.0, %v457
  %v459 = vpop.f32.mrb[0].mxu0
  %v460 = vadd.f32 0.0, %v459
  %461 = vmatprep.mubr.bf16.mxu0 0
  %462 = vmatmul.mubr.bf16.gmra.mrb[0].mxu0 %v275
  %v463 = vpop.f32.mrb[0].mxu0
  %v464 = vadd.f32 0.0, %v463
  %v465 = vpop.f32.mrb[0].mxu0
  %v466 = vadd.f32 0.0, %v465
  %v467 = vpop.f32.mrb[0].mxu0
  %v468 = vadd.f32 0.0, %v467
  %v469 = vpop.f32.mrb[0].mxu0
  %v470 = vadd.f32 0.0, %v469
  %471 = vmatprep.mubr.bf16.mxu0 0
  %472 = vmatmul.mubr.bf16.gmra.mrb[0].mxu0 %v278
  %v473 = vpop.f32.mrb[0].mxu0
  %v474 = vadd.f32 0.0, %v473
  %v475 = vpop.f32.mrb[0].mxu0
  %v476 = vadd.f32 0.0, %v475
  %v477 = vpop.f32.mrb[0].mxu0
  %v478 = vadd.f32 0.0, %v477
  %v479 = vpop.f32.mrb[0].mxu0
  %v480 = vadd.f32 0.0, %v479
  %481 = vmatprep.mubr.bf16.mxu0 0
  %482 = vmatmul.mubr.bf16.gmra.mrb[0].mxu0 %v281
  %v483 = vpop.f32.mrb[0].mxu0
  %v484 = vadd.f32 0.0, %v483
  %v485 = vpop.f32.mrb[0].mxu0
  %v486 = vadd.f32 0.0, %v485
  %v487 = vpop.f32.mrb[0].mxu0
  %v488 = vadd.f32 0.0, %v487
  %v489 = vpop.f32.mrb[0].mxu0
  %v490 = vadd.f32 0.0, %v489
  %491 = vmatprep.mubr.bf16.mxu0 0
  %492 = vmatmul.mubr.bf16.gmra.mrb[0].mxu0 %v284
  %v493 = vpop.f32.mrb[0].mxu0
  %v494 = vadd.f32 0.0, %v493
  %v495 = vpop.f32.mrb[0].mxu0
  %v496 = vadd.f32 0.0, %v495
  %v497 = vpop.f32.mrb[0].mxu0
  %v498 = vadd.f32 0.0, %v497
  %v499 = vpop.f32.mrb[0].mxu0
  %v500 = vadd.f32 0.0, %v499
  %501 = vmatprep.mubr.bf16.mxu0 0
  %502 = vmatmul.mubr.bf16.gmra.mrb[0].mxu0 %v287
  %v503 = vpop.f32.mrb[0].mxu0
  %v504 = vadd.f32 0.0, %v503
  %v505 = vpop.f32.mrb[0].mxu0
  %v506 = vadd.f32 0.0, %v505
  %v507 = vpop.f32.mrb[0].mxu0
  %v508 = vadd.f32 0.0, %v507
  %v509 = vpop.f32.mrb[0].mxu0
  %v510 = vadd.f32 0.0, %v509
  %511 = vmatprep.mubr.bf16.mxu0 0
  %512 = vmatmul.mubr.bf16.gmra.mrb[0].mxu0 %v290
  %v513 = vpop.f32.mrb[0].mxu0
  %v514 = vadd.f32 0.0, %v513
  %v515 = vpop.f32.mrb[0].mxu0
  %v516 = vadd.f32 0.0, %v515
  %v517 = vpop.f32.mrb[0].mxu0
  %v518 = vadd.f32 0.0, %v517
  %v519 = vpop.f32.mrb[0].mxu0
  %v520 = vadd.f32 0.0, %v519
  %521 = vmatprep.mubr.bf16.mxu0 0
  %522 = vmatmul.mubr.bf16.gmra.mrb[0].mxu0 %v293
  %v523 = vpop.f32.mrb[0].mxu0
  %v524 = vadd.f32 0.0, %v523
  %v525 = vpop.f32.mrb[0].mxu0
  %v526 = vadd.f32 0.0, %v525
  %v527 = vpop.f32.mrb[0].mxu0
  %v528 = vadd.f32 0.0, %v527
  %v529 = vpop.f32.mrb[0].mxu0
  %v530 = vadd.f32 0.0, %v529
  %531 = vmatprep.mubr.bf16.mxu0 0
  %532 = vmatmul.mubr.bf16.gmra.mrb[0].mxu0 %v296
  %v533 = vpop.f32.mrb[0].mxu0
  %v534 = vadd.f32 0.0, %v533
  %v535 = vpop.f32.mrb[0].mxu0
  %v536 = vadd.f32 0.0, %v535
  %v537 = vpop.f32.mrb[0].mxu0
  %v538 = vadd.f32 0.0, %v537
  %v539 = vpop.f32.mrb[0].mxu0
  %v540 = vadd.f32 0.0, %v539
  %541 = vmatprep.mubr.bf16.mxu0 0
  %542 = vmatmul.mubr.bf16.gmra.mrb[0].mxu0 %v299
  %v543 = vpop.f32.mrb[0].mxu0
  %v544 = vadd.f32 0.0, %v543
  %v545 = vpop.f32.mrb[0].mxu0
  %v546 = vadd.f32 0.0, %v545
  %v547 = vpop.f32.mrb[0].mxu0
  %v548 = vadd.f32 0.0, %v547
  %v549 = vpop.f32.mrb[0].mxu0
  %v550 = vadd.f32 0.0, %v549
  %551 = vmatprep.mubr.bf16.mxu0 0
  %552 = vmatmul.mubr.bf16.gmra.mrb[0].mxu0 %v302
  %v553 = vpop.f32.mrb[0].mxu0
  %v554 = vadd.f32 0.0, %v553
  %v555 = vpop.f32.mrb[0].mxu0
  %v556 = vadd.f32 0.0, %v555
  %v557 = vpop.f32.mrb[0].mxu0
  %v558 = vadd.f32 0.0, %v557
  %v559 = vpop.f32.mrb[0].mxu0
  %v560 = vadd.f32 0.0, %v559
  %561 = vmatprep.mubr.bf16.mxu0 0
  %562 = vmatmul.mubr.bf16.gmra.mrb[0].mxu0 %v305
  %v563 = vpop.f32.mrb[0].mxu0
  %v564 = vadd.f32 0.0, %v563
  %v565 = vpop.f32.mrb[0].mxu0
  %v566 = vadd.f32 0.0, %v565
  %v567 = vpop.f32.mrb[0].mxu0
  %v568 = vadd.f32 0.0, %v567
  %v569 = vpop.f32.mrb[0].mxu0
  %v570 = vadd.f32 0.0, %v569
  %571 = vmatprep.mubr.bf16.mxu0 0
  %572 = vmatmul.mubr.bf16.gmra.mrb[0].mxu0 %v308
  %v573 = vpop.f32.mrb[0].mxu0
  %v574 = vadd.f32 0.0, %v573
  %v575 = vpop.f32.mrb[0].mxu0
  %v576 = vadd.f32 0.0, %v575
  %v577 = vpop.f32.mrb[0].mxu0
  %v578 = vadd.f32 0.0, %v577
  %v579 = vpop.f32.mrb[0].mxu0
  %v580 = vadd.f32 0.0, %v579
  %581 = vmatprep.mubr.bf16.mxu0 0
  %582 = vmatmul.mubr.bf16.gmra.mrb[0].mxu0 %v311
  %v583 = vpop.f32.mrb[0].mxu0
  %v584 = vadd.f32 0.0, %v583
  %v585 = vpop.f32.mrb[0].mxu0
  %v586 = vadd.f32 0.0, %v585
  %v587 = vpop.f32.mrb[0].mxu0
  %v588 = vadd.f32 0.0, %v587
  %v589 = vpop.f32.mrb[0].mxu0
  %v590 = vadd.f32 0.0, %v589
  %591 = vmatprep.mubr.bf16.mxu0 0
  %592 = vmatmul.mubr.bf16.gmra.mrb[0].mxu0 %v314
  %v593 = vpop.f32.mrb[0].mxu0
  %v594 = vadd.f32 0.0, %v593
  %v595 = vpop.f32.mrb[0].mxu0
  %v596 = vadd.f32 0.0, %v595
  %v597 = vpop.f32.mrb[0].mxu0
  %v598 = vadd.f32 0.0, %v597
  %v599 = vpop.f32.mrb[0].mxu0
  %v600 = vadd.f32 0.0, %v599
  %601 = vmatprep.mubr.bf16.mxu0 0
  %602 = vmatmul.mubr.bf16.gmra.mrb[0].mxu0 %v317
  %v603 = vpop.f32.mrb[0].mxu0
  %v604 = vadd.f32 0.0, %v603
  %v605 = vpop.f32.mrb[0].mxu0
  %v606 = vadd.f32 0.0, %v605
  %v607 = vpop.f32.mrb[0].mxu0
  %v608 = vadd.f32 0.0, %v607
  %v609 = vpop.f32.mrb[0].mxu0
  %v610 = vadd.f32 0.0, %v609
  %611 = vmatprep.mubr.bf16.mxu0 0
  %612 = vmatmul.mubr.bf16.gmra.mrb[0].mxu0 %v320
  %v613 = vpop.f32.mrb[0].mxu0
  %v614 = vadd.f32 0.0, %v613
  %v615 = vpop.f32.mrb[0].mxu0
  %v616 = vadd.f32 0.0, %v615
  %v617 = vpop.f32.mrb[0].mxu0
  %v618 = vadd.f32 0.0, %v617
  %v619 = vpop.f32.mrb[0].mxu0
  %v620 = vadd.f32 0.0, %v619
  %621 = vmatprep.mubr.bf16.mxu0 0
  %622 = vmatmul.mubr.bf16.gmra.mrb[0].mxu0 %v323
  %v623 = vpop.f32.mrb[0].mxu0
  %v624 = vadd.f32 0.0, %v623
  %v625 = vpop.f32.mrb[0].mxu0
  %v626 = vadd.f32 0.0, %v625
  %v627 = vpop.f32.mrb[0].mxu0
  %v628 = vadd.f32 0.0, %v627
  %v629 = vpop.f32.mrb[0].mxu0
  %v630 = vadd.f32 0.0, %v629
  %631 = vmatprep.mubr.bf16.mxu0 0
  %632 = vmatmul.mubr.bf16.gmra.mrb[0].mxu0 %v326
  %v633 = vpop.f32.mrb[0].mxu0
  %v634 = vadd.f32 0.0, %v633
  %v635 = vpop.f32.mrb[0].mxu0
  %v636 = vadd.f32 0.0, %v635
  %v637 = vpop.f32.mrb[0].mxu0
  %v638 = vadd.f32 0.0, %v637
  %v639 = vpop.f32.mrb[0].mxu0
  %v640 = vadd.f32 0.0, %v639
  %641 = vmatprep.mubr.bf16.mxu0 0
  %642 = vmatmul.mubr.bf16.gmra.mrb[0].mxu0 %v329
  %v643 = vpop.f32.mrb[0].mxu0
  %v644 = vadd.f32 0.0, %v643
  %v645 = vpop.f32.mrb[0].mxu0
  %v646 = vadd.f32 0.0, %v645
  %v647 = vpop.f32.mrb[0].mxu0
  %v648 = vadd.f32 0.0, %v647
  %v649 = vpop.f32.mrb[0].mxu0
  %v650 = vadd.f32 0.0, %v649
  %651 = vmatprep.mubr.bf16.mxu0 0
  %652 = vmatmul.mubr.bf16.gmra.mrb[0].mxu0 %v332
  %v653 = vpop.f32.mrb[0].mxu0
  %v654 = vadd.f32 0.0, %v653
  %v655 = vpop.f32.mrb[0].mxu0
  %v656 = vadd.f32 0.0, %v655
  %v657 = vpop.f32.mrb[0].mxu0
  %v658 = vadd.f32 0.0, %v657
  %v659 = vpop.f32.mrb[0].mxu0
  %v660 = vadd.f32 0.0, %v659
  %661 = vmatprep.mubr.bf16.mxu0 0
  %662 = vmatmul.mubr.bf16.gmra.mrb[0].mxu0 %v335
  %v663 = vpop.f32.mrb[0].mxu0
  %v664 = vadd.f32 0.0, %v663
  %v665 = vpop.f32.mrb[0].mxu0
  %v666 = vadd.f32 0.0, %v665
  %v667 = vpop.f32.mrb[0].mxu0
  %v668 = vadd.f32 0.0, %v667
  %v669 = vpop.f32.mrb[0].mxu0
  %v670 = vadd.f32 0.0, %v669
  %671 = vmatprep.mubr.bf16.mxu0 0
  %672 = vmatmul.mubr.bf16.gmra.mrb[0].mxu0 %v338
  %v673 = vpop.f32.mrb[0].mxu0
  %v674 = vadd.f32 0.0, %v673
  %v675 = vpop.f32.mrb[0].mxu0
  %v676 = vadd.f32 0.0, %v675
  %v677 = vpop.f32.mrb[0].mxu0
  %v678 = vadd.f32 0.0, %v677
  %v679 = vpop.f32.mrb[0].mxu0
  %v680 = vadd.f32 0.0, %v679
  %681 = vmatprep.mubr.bf16.mxu0 0
  %682 = vmatmul.mubr.bf16.gmra.mrb[0].mxu0 %v341
  %v683 = vpop.f32.mrb[0].mxu0
  %v684 = vadd.f32 0.0, %v683
  %v685 = vpop.f32.mrb[0].mxu0
  %v686 = vadd.f32 0.0, %v685
  %v687 = vpop.f32.mrb[0].mxu0
  %v688 = vadd.f32 0.0, %v687
  %v689 = vpop.f32.mrb[0].mxu0
  %v690 = vadd.f32 0.0, %v689
  %691 = vmatprep.mubr.bf16.mxu0 0
  %692 = vmatmul.mubr.bf16.gmra.mrb[0].mxu0 %v344
  %v693 = vpop.f32.mrb[0].mxu0
  %v694 = vadd.f32 0.0, %v693
  %v695 = vpop.f32.mrb[0].mxu0
  %v696 = vadd.f32 0.0, %v695
  %v697 = vpop.f32.mrb[0].mxu0
  %v698 = vadd.f32 0.0, %v697
  %v699 = vpop.f32.mrb[0].mxu0
  %v700 = vadd.f32 0.0, %v699
  %701 = vmatprep.mubr.bf16.mxu0 0
  %702 = vmatmul.mubr.bf16.gmra.mrb[0].mxu0 %v347
  %v703 = vpop.f32.mrb[0].mxu0
  %v704 = vadd.f32 0.0, %v703
  %v705 = vpop.f32.mrb[0].mxu0
  %v706 = vadd.f32 0.0, %v705
  %v707 = vpop.f32.mrb[0].mxu0
  %v708 = vadd.f32 0.0, %v707
  %v709 = vpop.f32.mrb[0].mxu0
  %v710 = vadd.f32 0.0, %v709
  %711 = vdwg.mxu0
  %712 = vmatprep.subr.bf16.mxu0 0
  %713 = vmatpush1.bf16.msra.mxu0 %v357
  %714 = vmatprep.subr.bf16.mxu0 0
  %715 = vmatpush1.bf16.msra.mxu0 0
  %716 = vmatprep.subr.bf16.mxu0 0
  %717 = vmatpush1.bf16.msra.mxu0 0
  %718 = vmatprep.subr.bf16.mxu0 0
  %719 = vmatpush1.bf16.msra.mxu0 0
  %720 = vmatprep.subr.bf16.mxu0 0
  %721 = vmatpush1.bf16.msra.mxu0 0
  %722 = vmatprep.subr.bf16.mxu0 0
  %723 = vmatpush1.bf16.msra.mxu0 0
  %724 = vmatprep.subr.bf16.mxu0 0
  %725 = vmatpush1.bf16.msra.mxu0 0
  %726 = vmatprep.subr.bf16.mxu0 0
  %727 = vmatpush1.bf16.msra.mxu0 0
  %728 = vmatprep.subr.bf16.mxu0 0
  %729 = vmatpush1.bf16.msra.mxu0 0
  %730 = vmatprep.subr.bf16.mxu0 0
  %731 = vmatpush1.bf16.msra.mxu0 0
  %732 = vmatprep.subr.bf16.mxu0 0
  %733 = vmatpush1.bf16.msra.mxu0 0
  %734 = vmatprep.subr.bf16.mxu0 0
  %735 = vmatpush1.bf16.msra.mxu0 0
  %736 = vmatprep.subr.bf16.mxu0 0
  %737 = vmatpush1.bf16.msra.mxu0 0
  %738 = vmatprep.subr.bf16.mxu0 0
  %739 = vmatpush1.bf16.msra.mxu0 0
  %740 = vmatprep.subr.bf16.mxu0 0
  %741 = vmatpush1.bf16.msra.mxu0 0
  %742 = vmatprep.subr.bf16.mxu0 0
  %743 = vmatpush1.bf16.msra.mxu0 0
  %744 = vmatprep.mubr.bf16.mxu0 0
  %745 = vmatmul.mubr.bf16.gmra.mrb[0].mxu0 %v254
  %v746 = vpop.f32.mrb[0].mxu0
  %v747 = vadd.f32 0.0, %v746
  %v748 = vpop.f32.mrb[0].mxu0
  %v749 = vpop.f32.mrb[0].mxu0
  %v750 = vadd.f32 0.0, %v749
  %v751 = vpop.f32.mrb[0].mxu0
  %752 = vmatprep.mubr.bf16.mxu0 0
  %753 = vmatmul.mubr.bf16.gmra.mrb[0].mxu0 %v257
  %v754 = vpop.f32.mrb[0].mxu0
  %v755 = vadd.f32 0.0, %v754
  %v756 = vpop.f32.mrb[0].mxu0
  %v757 = vpop.f32.mrb[0].mxu0
  %v758 = vadd.f32 0.0, %v757
  %v759 = vpop.f32.mrb[0].mxu0
  %760 = vmatprep.mubr.bf16.mxu0 0
  %761 = vmatmul.mubr.bf16.gmra.mrb[0].mxu0 %v260
  %v762 = vpop.f32.mrb[0].mxu0
  %v763 = vadd.f32 0.0, %v762
  %v764 = vpop.f32.mrb[0].mxu0
  %v765 = vpop.f32.mrb[0].mxu0
  %v766 = vadd.f32 0.0, %v765
  %v767 = vpop.f32.mrb[0].mxu0
  %768 = vmatprep.mubr.bf16.mxu0 0
  %769 = vmatmul.mubr.bf16.gmra.mrb[0].mxu0 %v263
  %v770 = vpop.f32.mrb[0].mxu0
  %v771 = vadd.f32 0.0, %v770
  %v772 = vpop.f32.mrb[0].mxu0
  %v773 = vpop.f32.mrb[0].mxu0
  %v774 = vadd.f32 0.0, %v773
  %v775 = vpop.f32.mrb[0].mxu0
  %776 = vmatprep.mubr.bf16.mxu0 0
  %777 = vmatmul.mubr.bf16.gmra.mrb[0].mxu0 %v266
  %v778 = vpop.f32.mrb[0].mxu0
  %v779 = vadd.f32 0.0, %v778
  %v780 = vpop.f32.mrb[0].mxu0
  %v781 = vpop.f32.mrb[0].mxu0
  %v782 = vadd.f32 0.0, %v781
  %v783 = vpop.f32.mrb[0].mxu0
  %784 = vmatprep.mubr.bf16.mxu0 0
  %785 = vmatmul.mubr.bf16.gmra.mrb[0].mxu0 %v269
  %v786 = vpop.f32.mrb[0].mxu0
  %v787 = vadd.f32 0.0, %v786
  %v788 = vpop.f32.mrb[0].mxu0
  %v789 = vpop.f32.mrb[0].mxu0
  %v790 = vadd.f32 0.0, %v789
  %v791 = vpop.f32.mrb[0].mxu0
  %792 = vmatprep.mubr.bf16.mxu0 0
  %793 = vmatmul.mubr.bf16.gmra.mrb[0].mxu0 %v272
  %v794 = vpop.f32.mrb[0].mxu0
  %v795 = vadd.f32 0.0, %v794
  %v796 = vpop.f32.mrb[0].mxu0
  %v797 = vpop.f32.mrb[0].mxu0
  %v798 = vadd.f32 0.0, %v797
  %v799 = vpop.f32.mrb[0].mxu0
  %800 = vmatprep.mubr.bf16.mxu0 0
  %801 = vmatmul.mubr.bf16.gmra.mrb[0].mxu0 %v275
  %v802 = vpop.f32.mrb[0].mxu0
  %v803 = vadd.f32 0.0, %v802
  %v804 = vpop.f32.mrb[0].mxu0
  %v805 = vpop.f32.mrb[0].mxu0
  %v806 = vadd.f32 0.0, %v805
  %v807 = vpop.f32.mrb[0].mxu0
  %808 = vmatprep.mubr.bf16.mxu0 0
  %809 = vmatmul.mubr.bf16.gmra.mrb[0].mxu0 %v278
  %v810 = vpop.f32.mrb[0].mxu0
  %v811 = vadd.f32 0.0, %v810
  %v812 = vpop.f32.mrb[0].mxu0
  %v813 = vpop.f32.mrb[0].mxu0
  %v814 = vadd.f32 0.0, %v813
  %v815 = vpop.f32.mrb[0].mxu0
  %816 = vmatprep.mubr.bf16.mxu0 0
  %817 = vmatmul.mubr.bf16.gmra.mrb[0].mxu0 %v281
  %v818 = vpop.f32.mrb[0].mxu0
  %v819 = vadd.f32 0.0, %v818
  %v820 = vpop.f32.mrb[0].mxu0
  %v821 = vpop.f32.mrb[0].mxu0
  %v822 = vadd.f32 0.0, %v821
  %v823 = vpop.f32.mrb[0].mxu0
  %824 = vmatprep.mubr.bf16.mxu0 0
  %825 = vmatmul.mubr.bf16.gmra.mrb[0].mxu0 %v284
  %v826 = vpop.f32.mrb[0].mxu0
  %v827 = vadd.f32 0.0, %v826
  %v828 = vpop.f32.mrb[0].mxu0
  %v829 = vpop.f32.mrb[0].mxu0
  %v830 = vadd.f32 0.0, %v829
  %v831 = vpop.f32.mrb[0].mxu0
  %832 = vmatprep.mubr.bf16.mxu0 0
  %833 = vmatmul.mubr.bf16.gmra.mrb[0].mxu0 %v287
  %v834 = vpop.f32.mrb[0].mxu0
  %v835 = vadd.f32 0.0, %v834
  %v836 = vpop.f32.mrb[0].mxu0
  %v837 = vpop.f32.mrb[0].mxu0
  %v838 = vadd.f32 0.0, %v837
  %v839 = vpop.f32.mrb[0].mxu0
  %840 = vmatprep.mubr.bf16.mxu0 0
  %841 = vmatmul.mubr.bf16.gmra.mrb[0].mxu0 %v290
  %v842 = vpop.f32.mrb[0].mxu0
  %v843 = vadd.f32 0.0, %v842
  %v844 = vpop.f32.mrb[0].mxu0
  %v845 = vpop.f32.mrb[0].mxu0
  %v846 = vadd.f32 0.0, %v845
  %v847 = vpop.f32.mrb[0].mxu0
  %848 = vmatprep.mubr.bf16.mxu0 0
  %849 = vmatmul.mubr.bf16.gmra.mrb[0].mxu0 %v293
  %v850 = vpop.f32.mrb[0].mxu0
  %v851 = vadd.f32 0.0, %v850
  %v852 = vpop.f32.mrb[0].mxu0
  %v853 = vpop.f32.mrb[0].mxu0
  %v854 = vadd.f32 0.0, %v853
  %v855 = vpop.f32.mrb[0].mxu0
  %856 = vmatprep.mubr.bf16.mxu0 0
  %857 = vmatmul.mubr.bf16.gmra.mrb[0].mxu0 %v296
  %v858 = vpop.f32.mrb[0].mxu0
  %v859 = vadd.f32 0.0, %v858
  %v860 = vpop.f32.mrb[0].mxu0
  %v861 = vpop.f32.mrb[0].mxu0
  %v862 = vadd.f32 0.0, %v861
  %v863 = vpop.f32.mrb[0].mxu0
  %864 = vmatprep.mubr.bf16.mxu0 0
  %865 = vmatmul.mubr.bf16.gmra.mrb[0].mxu0 %v299
  %v866 = vpop.f32.mrb[0].mxu0
  %v867 = vadd.f32 0.0, %v866
  %v868 = vpop.f32.mrb[0].mxu0
  %v869 = vpop.f32.mrb[0].mxu0
  %v870 = vadd.f32 0.0, %v869
  %v871 = vpop.f32.mrb[0].mxu0
  %872 = vmatprep.mubr.bf16.mxu0 0
  %873 = vmatmul.mubr.bf16.gmra.mrb[0].mxu0 %v302
  %v874 = vpop.f32.mrb[0].mxu0
  %v875 = vadd.f32 0.0, %v874
  %v876 = vpop.f32.mrb[0].mxu0
  %v877 = vpop.f32.mrb[0].mxu0
  %v878 = vadd.f32 0.0, %v877
  %v879 = vpop.f32.mrb[0].mxu0
  %880 = vmatprep.mubr.bf16.mxu0 0
  %881 = vmatmul.mubr.bf16.gmra.mrb[0].mxu0 %v305
  %v882 = vpop.f32.mrb[0].mxu0
  %v883 = vadd.f32 0.0, %v882
  %v884 = vpop.f32.mrb[0].mxu0
  %v885 = vpop.f32.mrb[0].mxu0
  %v886 = vadd.f32 0.0, %v885
  %v887 = vpop.f32.mrb[0].mxu0
  %888 = vmatprep.mubr.bf16.mxu0 0
  %889 = vmatmul.mubr.bf16.gmra.mrb[0].mxu0 %v308
  %v890 = vpop.f32.mrb[0].mxu0
  %v891 = vadd.f32 0.0, %v890
  %v892 = vpop.f32.mrb[0].mxu0
  %v893 = vpop.f32.mrb[0].mxu0
  %v894 = vadd.f32 0.0, %v893
  %v895 = vpop.f32.mrb[0].mxu0
  %896 = vmatprep.mubr.bf16.mxu0 0
  %897 = vmatmul.mubr.bf16.gmra.mrb[0].mxu0 %v311
  %v898 = vpop.f32.mrb[0].mxu0
  %v899 = vadd.f32 0.0, %v898
  %v900 = vpop.f32.mrb[0].mxu0
  %v901 = vpop.f32.mrb[0].mxu0
  %v902 = vadd.f32 0.0, %v901
  %v903 = vpop.f32.mrb[0].mxu0
  %904 = vmatprep.mubr.bf16.mxu0 0
  %905 = vmatmul.mubr.bf16.gmra.mrb[0].mxu0 %v314
  %v906 = vpop.f32.mrb[0].mxu0
  %v907 = vadd.f32 0.0, %v906
  %v908 = vpop.f32.mrb[0].mxu0
  %v909 = vpop.f32.mrb[0].mxu0
  %v910 = vadd.f32 0.0, %v909
  %v911 = vpop.f32.mrb[0].mxu0
  %912 = vmatprep.mubr.bf16.mxu0 0
  %913 = vmatmul.mubr.bf16.gmra.mrb[0].mxu0 %v317
  %v914 = vpop.f32.mrb[0].mxu0
  %v915 = vadd.f32 0.0, %v914
  %v916 = vpop.f32.mrb[0].mxu0
  %v917 = vpop.f32.mrb[0].mxu0
  %v918 = vadd.f32 0.0, %v917
  %v919 = vpop.f32.mrb[0].mxu0
  %920 = vmatprep.mubr.bf16.mxu0 0
  %921 = vmatmul.mubr.bf16.gmra.mrb[0].mxu0 %v320
  %v922 = vpop.f32.mrb[0].mxu0
  %v923 = vadd.f32 0.0, %v922
  %v924 = vpop.f32.mrb[0].mxu0
  %v925 = vpop.f32.mrb[0].mxu0
  %v926 = vadd.f32 0.0, %v925
  %v927 = vpop.f32.mrb[0].mxu0
  %928 = vmatprep.mubr.bf16.mxu0 0
  %929 = vmatmul.mubr.bf16.gmra.mrb[0].mxu0 %v323
  %v930 = vpop.f32.mrb[0].mxu0
  %v931 = vadd.f32 0.0, %v930
  %v932 = vpop.f32.mrb[0].mxu0
  %v933 = vpop.f32.mrb[0].mxu0
  %v934 = vadd.f32 0.0, %v933
  %v935 = vpop.f32.mrb[0].mxu0
  %936 = vmatprep.mubr.bf16.mxu0 0
  %937 = vmatmul.mubr.bf16.gmra.mrb[0].mxu0 %v326
  %v938 = vpop.f32.mrb[0].mxu0
  %v939 = vadd.f32 0.0, %v938
  %v940 = vpop.f32.mrb[0].mxu0
  %v941 = vpop.f32.mrb[0].mxu0
  %v942 = vadd.f32 0.0, %v941
  %v943 = vpop.f32.mrb[0].mxu0
  %944 = vmatprep.mubr.bf16.mxu0 0
  %945 = vmatmul.mubr.bf16.gmra.mrb[0].mxu0 %v329
  %v946 = vpop.f32.mrb[0].mxu0
  %v947 = vadd.f32 0.0, %v946
  %v948 = vpop.f32.mrb[0].mxu0
  %v949 = vpop.f32.mrb[0].mxu0
  %v950 = vadd.f32 0.0, %v949
  %v951 = vpop.f32.mrb[0].mxu0
  %952 = vmatprep.mubr.bf16.mxu0 0
  %953 = vmatmul.mubr.bf16.gmra.mrb[0].mxu0 %v332
  %v954 = vpop.f32.mrb[0].mxu0
  %v955 = vadd.f32 0.0, %v954
  %v956 = vpop.f32.mrb[0].mxu0
  %v957 = vpop.f32.mrb[0].mxu0
  %v958 = vadd.f32 0.0, %v957
  %v959 = vpop.f32.mrb[0].mxu0
  %960 = vmatprep.mubr.bf16.mxu0 0
  %961 = vmatmul.mubr.bf16.gmra.mrb[0].mxu0 %v335
  %v962 = vpop.f32.mrb[0].mxu0
  %v963 = vadd.f32 0.0, %v962
  %v964 = vpop.f32.mrb[0].mxu0
  %v965 = vpop.f32.mrb[0].mxu0
  %v966 = vadd.f32 0.0, %v965
  %v967 = vpop.f32.mrb[0].mxu0
  %968 = vmatprep.mubr.bf16.mxu0 0
  %969 = vmatmul.mubr.bf16.gmra.mrb[0].mxu0 %v338
  %v970 = vpop.f32.mrb[0].mxu0
  %v971 = vadd.f32 0.0, %v970
  %v972 = vpop.f32.mrb[0].mxu0
  %v973 = vpop.f32.mrb[0].mxu0
  %v974 = vadd.f32 0.0, %v973
  %v975 = vpop.f32.mrb[0].mxu0
  %976 = vmatprep.mubr.bf16.mxu0 0
  %977 = vmatmul.mubr.bf16.gmra.mrb[0].mxu0 %v341
  %v978 = vpop.f32.mrb[0].mxu0
  %v979 = vadd.f32 0.0, %v978
  %v980 = vpop.f32.mrb[0].mxu0
  %v981 = vpop.f32.mrb[0].mxu0
  %v982 = vadd.f32 0.0, %v981
  %v983 = vpop.f32.mrb[0].mxu0
  %984 = vmatprep.mubr.bf16.mxu0 0
  %985 = vmatmul.mubr.bf16.gmra.mrb[0].mxu0 %v344
  %v986 = vpop.f32.mrb[0].mxu0
  %v987 = vadd.f32 0.0, %v986
  %v988 = vpop.f32.mrb[0].mxu0
  %v989 = vpop.f32.mrb[0].mxu0
  %v990 = vadd.f32 0.0, %v989
  %v991 = vpop.f32.mrb[0].mxu0
  %992 = vmatprep.mubr.bf16.mxu0 0
  %993 = vmatmul.mubr.bf16.gmra.mrb[0].mxu0 %v347
  %v994 = vpop.f32.mrb[0].mxu0
  %v995 = vadd.f32 0.0, %v994
  %v996 = vpop.f32.mrb[0].mxu0
  %v997 = vpop.f32.mrb[0].mxu0
  %v998 = vadd.f32 0.0, %v997
  %v999 = vpop.f32.mrb[0].mxu0
  %1000 = vdwg.mxu0
  %v1001 = vmax.f32 %v394, 0.0
  %v1002 = vmax.f32 %v396, 0.0
  %v1003 = vmax.f32 %v747, 0.0
  %v1004 = vmax.f32 %v398, 0.0
  %v1005 = vmax.f32 %v400, 0.0
  %v1006 = vmax.f32 %v750, 0.0
  %v1007 = vmax.f32 %v404, 0.0
  %v1008 = vmax.f32 %v406, 0.0
  %v1009 = vmax.f32 %v755, 0.0
  %v1010 = vmax.f32 %v408, 0.0
  %v1011 = vmax.f32 %v410, 0.0
  %v1012 = vmax.f32 %v758, 0.0
  %v1013 = vmax.f32 %v414, 0.0
  %v1014 = vmax.f32 %v416, 0.0
  %v1015 = vmax.f32 %v763, 0.0
  %v1016 = vmax.f32 %v418, 0.0
  %v1017 = vmax.f32 %v420, 0.0
  %v1018 = vmax.f32 %v766, 0.0
  %v1019 = vmax.f32 %v424, 0.0
  %v1020 = vmax.f32 %v426, 0.0
  %v1021 = vmax.f32 %v771, 0.0
  %v1022 = vmax.f32 %v428, 0.0
  %v1023 = vmax.f32 %v430, 0.0
  %v1024 = vmax.f32 %v774, 0.0
  %v1025 = vmax.f32 %v434, 0.0
  %v1026 = vmax.f32 %v436, 0.0
  %v1027 = vmax.f32 %v779, 0.0
  %v1028 = vmax.f32 %v438, 0.0
  %v1029 = vmax.f32 %v440, 0.0
  %v1030 = vmax.f32 %v782, 0.0
  %v1031 = vmax.f32 %v444, 0.0
  %v1032 = vmax.f32 %v446, 0.0
  %v1033 = vmax.f32 %v787, 0.0
  %v1034 = vmax.f32 %v448, 0.0
  %v1035 = vmax.f32 %v450, 0.0
  %v1036 = vmax.f32 %v790, 0.0
  %v1037 = vmax.f32 %v454, 0.0
  %v1038 = vmax.f32 %v456, 0.0
  %v1039 = vmax.f32 %v795, 0.0
  %v1040 = vmax.f32 %v458, 0.0
  %v1041 = vmax.f32 %v460, 0.0
  %v1042 = vmax.f32 %v798, 0.0
  %v1043 = vmax.f32 %v464, 0.0
  %v1044 = vmax.f32 %v466, 0.0
  %v1045 = vmax.f32 %v803, 0.0
  %v1046 = vmax.f32 %v468, 0.0
  %v1047 = vmax.f32 %v470, 0.0
  %v1048 = vmax.f32 %v806, 0.0
  %v1049 = vmax.f32 %v474, 0.0
  %v1050 = vmax.f32 %v476, 0.0
  %v1051 = vmax.f32 %v811, 0.0
  %v1052 = vmax.f32 %v478, 0.0
  %v1053 = vmax.f32 %v480, 0.0
  %v1054 = vmax.f32 %v814, 0.0
  %v1055 = vmax.f32 %v484, 0.0
  %v1056 = vmax.f32 %v486, 0.0
  %v1057 = vmax.f32 %v819, 0.0
  %v1058 = vmax.f32 %v488, 0.0
  %v1059 = vmax.f32 %v490, 0.0
  %v1060 = vmax.f32 %v822, 0.0
  %v1061 = vmax.f32 %v494, 0.0
  %v1062 = vmax.f32 %v496, 0.0
  %v1063 = vmax.f32 %v827, 0.0
  %v1064 = vmax.f32 %v498, 0.0
  %v1065 = vmax.f32 %v500, 0.0
  %v1066 = vmax.f32 %v830, 0.0
  %v1067 = vmax.f32 %v504, 0.0
  %v1068 = vmax.f32 %v506, 0.0
  %v1069 = vmax.f32 %v835, 0.0
  %v1070 = vmax.f32 %v508, 0.0
  %v1071 = vmax.f32 %v510, 0.0
  %v1072 = vmax.f32 %v838, 0.0
  %v1073 = vmax.f32 %v514, 0.0
  %v1074 = vmax.f32 %v516, 0.0
  %v1075 = vmax.f32 %v843, 0.0
  %v1076 = vmax.f32 %v518, 0.0
  %v1077 = vmax.f32 %v520, 0.0
  %v1078 = vmax.f32 %v846, 0.0
  %v1079 = vmax.f32 %v524, 0.0
  %v1080 = vmax.f32 %v526, 0.0
  %v1081 = vmax.f32 %v851, 0.0
  %v1082 = vmax.f32 %v528, 0.0
  %v1083 = vmax.f32 %v530, 0.0
  %v1084 = vmax.f32 %v854, 0.0
  %v1085 = vmax.f32 %v534, 0.0
  %v1086 = vmax.f32 %v536, 0.0
  %v1087 = vmax.f32 %v859, 0.0
  %v1088 = vmax.f32 %v538, 0.0
  %v1089 = vmax.f32 %v540, 0.0
  %v1090 = vmax.f32 %v862, 0.0
  %v1091 = vmax.f32 %v544, 0.0
  %v1092 = vmax.f32 %v546, 0.0
  %v1093 = vmax.f32 %v867, 0.0
  %v1094 = vmax.f32 %v548, 0.0
  %v1095 = vmax.f32 %v550, 0.0
  %v1096 = vmax.f32 %v870, 0.0
  %v1097 = vmax.f32 %v554, 0.0
  %v1098 = vmax.f32 %v556, 0.0
  %v1099 = vmax.f32 %v875, 0.0
  %v1100 = vmax.f32 %v558, 0.0
  %v1101 = vmax.f32 %v560, 0.0
  %v1102 = vmax.f32 %v878, 0.0
  %v1103 = vmax.f32 %v564, 0.0
  %v1104 = vmax.f32 %v566, 0.0
  %v1105 = vmax.f32 %v883, 0.0
  %v1106 = vmax.f32 %v568, 0.0
  %v1107 = vmax.f32 %v570, 0.0
  %v1108 = vmax.f32 %v886, 0.0
  %v1109 = vmax.f32 %v574, 0.0
  %v1110 = vmax.f32 %v576, 0.0
  %v1111 = vmax.f32 %v891, 0.0
  %v1112 = vmax.f32 %v578, 0.0
  %v1113 = vmax.f32 %v580, 0.0
  %v1114 = vmax.f32 %v894, 0.0
  %v1115 = vmax.f32 %v584, 0.0
  %v1116 = vmax.f32 %v586, 0.0
  %v1117 = vmax.f32 %v899, 0.0
  %v1118 = vmax.f32 %v588, 0.0
  %v1119 = vmax.f32 %v590, 0.0
  %v1120 = vmax.f32 %v902, 0.0
  %v1121 = vmax.f32 %v594, 0.0
  %v1122 = vmax.f32 %v596, 0.0
  %v1123 = vmax.f32 %v907, 0.0
  %v1124 = vmax.f32 %v598, 0.0
  %v1125 = vmax.f32 %v600, 0.0
  %v1126 = vmax.f32 %v910, 0.0
  %v1127 = vmax.f32 %v604, 0.0
  %v1128 = vmax.f32 %v606, 0.0
  %v1129 = vmax.f32 %v915, 0.0
  %v1130 = vmax.f32 %v608, 0.0
  %v1131 = vmax.f32 %v610, 0.0
  %v1132 = vmax.f32 %v918, 0.0
  %v1133 = vmax.f32 %v614, 0.0
  %v1134 = vmax.f32 %v616, 0.0
  %v1135 = vmax.f32 %v923, 0.0
  %v1136 = vmax.f32 %v618, 0.0
  %v1137 = vmax.f32 %v620, 0.0
  %v1138 = vmax.f32 %v926, 0.0
  %v1139 = vmax.f32 %v624, 0.0
  %v1140 = vmax.f32 %v626, 0.0
  %v1141 = vmax.f32 %v931, 0.0
  %v1142 = vmax.f32 %v628, 0.0
  %v1143 = vmax.f32 %v630, 0.0
  %v1144 = vmax.f32 %v934, 0.0
  %v1145 = vmax.f32 %v634, 0.0
  %v1146 = vmax.f32 %v636, 0.0
  %v1147 = vmax.f32 %v939, 0.0
  %v1148 = vmax.f32 %v638, 0.0
  %v1149 = vmax.f32 %v640, 0.0
  %v1150 = vmax.f32 %v942, 0.0
  %v1151 = vmax.f32 %v644, 0.0
  %v1152 = vmax.f32 %v646, 0.0
  %v1153 = vmax.f32 %v947, 0.0
  %v1154 = vmax.f32 %v648, 0.0
  %v1155 = vmax.f32 %v650, 0.0
  %v1156 = vmax.f32 %v950, 0.0
  %v1157 = vmax.f32 %v654, 0.0
  %v1158 = vmax.f32 %v656, 0.0
  %v1159 = vmax.f32 %v955, 0.0
  %v1160 = vmax.f32 %v658, 0.0
  %v1161 = vmax.f32 %v660, 0.0
  %v1162 = vmax.f32 %v958, 0.0
  %v1163 = vmax.f32 %v664, 0.0
  %v1164 = vmax.f32 %v666, 0.0
  %v1165 = vmax.f32 %v963, 0.0
  %v1166 = vmax.f32 %v668, 0.0
  %v1167 = vmax.f32 %v670, 0.0
  %v1168 = vmax.f32 %v966, 0.0
  %v1169 = vmax.f32 %v674, 0.0
  %v1170 = vmax.f32 %v676, 0.0
  %v1171 = vmax.f32 %v971, 0.0
  %v1172 = vmax.f32 %v678, 0.0
  %v1173 = vmax.f32 %v680, 0.0
  %v1174 = vmax.f32 %v974, 0.0
  %v1175 = vmax.f32 %v684, 0.0
  %v1176 = vmax.f32 %v686, 0.0
  %v1177 = vmax.f32 %v979, 0.0
  %v1178 = vmax.f32 %v688, 0.0
  %v1179 = vmax.f32 %v690, 0.0
  %v1180 = vmax.f32 %v982, 0.0
  %v1181 = vmax.f32 %v694, 0.0
  %v1182 = vmax.f32 %v696, 0.0
  %v1183 = vmax.f32 %v987, 0.0
  %v1184 = vmax.f32 %v698, 0.0
  %v1185 = vmax.f32 %v700, 0.0
  %v1186 = vmax.f32 %v990, 0.0
  %v1187 = vmax.f32 %v704, 0.0
  %v1188 = vmax.f32 %v706, 0.0
  %v1189 = vmax.f32 %v995, 0.0
  %v1190 = vmax.f32 %v708, 0.0
  %v1191 = vmax.f32 %v710, 0.0
  %v1192 = vmax.f32 %v998, 0.0
  %v1193 = vpack.c.bf16 %v1004, %v1001
  %v1194 = vpack.c.bf16 %v1005, %v1002
  %v1195 = vpack.c.bf16 %v1006, %v1003
  %v1196 = vpack.c.bf16 %v1010, %v1007
  %v1197 = vpack.c.bf16 %v1011, %v1008
  %v1198 = vpack.c.bf16 %v1012, %v1009
  %v1199 = vpack.c.bf16 %v1016, %v1013
  %v1200 = vpack.c.bf16 %v1017, %v1014
  %v1201 = vpack.c.bf16 %v1018, %v1015
  %v1202 = vpack.c.bf16 %v1022, %v1019
  %v1203 = vpack.c.bf16 %v1023, %v1020
  %v1204 = vpack.c.bf16 %v1024, %v1021
  %v1205 = vpack.c.bf16 %v1028, %v1025
  %v1206 = vpack.c.bf16 %v1029, %v1026
  %v1207 = vpack.c.bf16 %v1030, %v1027
  %v1208 = vpack.c.bf16 %v1034, %v1031
  %v1209 = vpack.c.bf16 %v1035, %v1032
  %v1210 = vpack.c.bf16 %v1036, %v1033
  %v1211 = vpack.c.bf16 %v1040, %v1037
  %v1212 = vpack.c.bf16 %v1041, %v1038
  %v1213 = vpack.c.bf16 %v1042, %v1039
  %v1214 = vpack.c.bf16 %v1046, %v1043
  %v1215 = vpack.c.bf16 %v1047, %v1044
  %v1216 = vpack.c.bf16 %v1048, %v1045
  %v1217 = vpack.c.bf16 %v1052, %v1049
  %v1218 = vpack.c.bf16 %v1053, %v1050
  %v1219 = vpack.c.bf16 %v1054, %v1051
  %v1220 = vpack.c.bf16 %v1058, %v1055
  %v1221 = vpack.c.bf16 %v1059, %v1056
  %v1222 = vpack.c.bf16 %v1060, %v1057
  %v1223 = vpack.c.bf16 %v1064, %v1061
  %v1224 = vpack.c.bf16 %v1065, %v1062
  %v1225 = vpack.c.bf16 %v1066, %v1063
  %v1226 = vpack.c.bf16 %v1070, %v1067
  %v1227 = vpack.c.bf16 %v1071, %v1068
  %v1228 = vpack.c.bf16 %v1072, %v1069
  %v1229 = vpack.c.bf16 %v1076, %v1073
  %v1230 = vpack.c.bf16 %v1077, %v1074
  %v1231 = vpack.c.bf16 %v1078, %v1075
  %v1232 = vpack.c.bf16 %v1082, %v1079
  %v1233 = vpack.c.bf16 %v1083, %v1080
  %v1234 = vpack.c.bf16 %v1084, %v1081
  %v1235 = vpack.c.bf16 %v1088, %v1085
  %v1236 = vpack.c.bf16 %v1089, %v1086
  %v1237 = vpack.c.bf16 %v1090, %v1087
  %v1238 = vpack.c.bf16 %v1094, %v1091
  %v1239 = vpack.c.bf16 %v1095, %v1092
  %v1240 = vpack.c.bf16 %v1096, %v1093
  %v1241 = vpack.c.bf16 %v1100, %v1097
  %v1242 = vpack.c.bf16 %v1101, %v1098
  %v1243 = vpack.c.bf16 %v1102, %v1099
  %v1244 = vpack.c.bf16 %v1106, %v1103
  %v1245 = vpack.c.bf16 %v1107, %v1104
  %v1246 = vpack.c.bf16 %v1108, %v1105
  %v1247 = vpack.c.bf16 %v1112, %v1109
  %v1248 = vpack.c.bf16 %v1113, %v1110
  %v1249 = vpack.c.bf16 %v1114, %v1111
  %v1250 = vpack.c.bf16 %v1118, %v1115
  %v1251 = vpack.c.bf16 %v1119, %v1116
  %v1252 = vpack.c.bf16 %v1120, %v1117
  %v1253 = vpack.c.bf16 %v1124, %v1121
  %v1254 = vpack.c.bf16 %v1125, %v1122
  %v1255 = vpack.c.bf16 %v1126, %v1123
  %v1256 = vpack.c.bf16 %v1130, %v1127
  %v1257 = vpack.c.bf16 %v1131, %v1128
  %v1258 = vpack.c.bf16 %v1132, %v1129
  %v1259 = vpack.c.bf16 %v1136, %v1133
  %v1260 = vpack.c.bf16 %v1137, %v1134
  %v1261 = vpack.c.bf16 %v1138, %v1135
  %v1262 = vpack.c.bf16 %v1142, %v1139
  %v1263 = vpack.c.bf16 %v1143, %v1140
  %v1264 = vpack.c.bf16 %v1144, %v1141
  %v1265 = vpack.c.bf16 %v1148, %v1145
  %v1266 = vpack.c.bf16 %v1149, %v1146
  %v1267 = vpack.c.bf16 %v1150, %v1147
  %v1268 = vpack.c.bf16 %v1154, %v1151
  %v1269 = vpack.c.bf16 %v1155, %v1152
  %v1270 = vpack.c.bf16 %v1156, %v1153
  %v1271 = vpack.c.bf16 %v1160, %v1157
  %v1272 = vpack.c.bf16 %v1161, %v1158
  %v1273 = vpack.c.bf16 %v1162, %v1159
  %v1274 = vpack.c.bf16 %v1166, %v1163
  %v1275 = vpack.c.bf16 %v1167, %v1164
  %v1276 = vpack.c.bf16 %v1168, %v1165
  %v1277 = vpack.c.bf16 %v1172, %v1169
  %v1278 = vpack.c.bf16 %v1173, %v1170
  %v1279 = vpack.c.bf16 %v1174, %v1171
  %v1280 = vpack.c.bf16 %v1178, %v1175
  %v1281 = vpack.c.bf16 %v1179, %v1176
  %v1282 = vpack.c.bf16 %v1180, %v1177
  %v1283 = vpack.c.bf16 %v1184, %v1181
  %v1284 = vpack.c.bf16 %v1185, %v1182
  %v1285 = vpack.c.bf16 %v1186, %v1183
  %v1286 = vpack.c.bf16 %v1190, %v1187
  %v1287 = vpack.c.bf16 %v1191, %v1188
  %v1288 = vpack.c.bf16 %v1192, %v1189
  %v1289 = vlaneseq
  %v1290 = vshrl.u32 %v1289, 7
  %v1291 = vlaneseq
  %v1292 = vand.u32 %v1291, 127
  %v1293 = vadd.s32 %v1292, 128
  %v1294 = vadd.s32 %v1292, 256
  %v1295 = vadd.s32 %v1292, 384
  %v1296 = vmul.u32 %v1290, 256
  %vm1297 = vcmp.ge.s32.totalorder %v1292, %v1296
  %vm1298 = vcmp.ge.s32.totalorder %v1293, %v1296
  %vm1299 = vcmp.ge.s32.totalorder %v1294, %v1296
  %vm1300 = vcmp.ge.s32.totalorder %v1295, %v1296
  %v1301 = vadd.s32 %v1290, 1
  %v1302 = vmul.u32 %v1301, 256
  %vm1303 = vcmp.lt.s32.totalorder %v1292, %v1302
  %vm1304 = vcmp.lt.s32.totalorder %v1293, %v1302
  %vm1305 = vcmp.lt.s32.totalorder %v1294, %v1302
  %vm1306 = vcmp.lt.s32.totalorder %v1295, %v1302
  %vm1307 = vmand %vm1297, %vm1303
  %vm1308 = vmand %vm1298, %vm1304
  %vm1309 = vmand %vm1299, %vm1305
  %vm1310 = vmand %vm1300, %vm1306
  %v1311 = vsel %vm1307, 0.00390625, 0.0
  %v1312 = vsel %vm1308, 0.00390625, 0.0
  %v1313 = vsel %vm1309, 0.00390625, 0.0
  %v1314 = vsel %vm1310, 0.00390625, 0.0
  %v1315 = vpack.c.bf16 %v1311, %v1311
  %v1316 = vpack.c.bf16 %v1312, %v1312
  %v1317 = vpack.c.bf16 %v1313, %v1313
  %v1318 = vpack.c.bf16 %v1314, %v1314
  %1319 = vmatprep.subr.bf16.mxu0 %v1194
  %1320 = vmatpush1.bf16.msra.mxu0 %v1193
  %1321 = vmatprep.subr.bf16.mxu0 %v1197
  %1322 = vmatpush1.bf16.msra.mxu0 %v1196
  %1323 = vmatprep.subr.bf16.mxu0 %v1200
  %1324 = vmatpush1.bf16.msra.mxu0 %v1199
  %1325 = vmatprep.subr.bf16.mxu0 %v1203
  %1326 = vmatpush1.bf16.msra.mxu0 %v1202
  %1327 = vmatprep.subr.bf16.mxu0 %v1206
  %1328 = vmatpush1.bf16.msra.mxu0 %v1205
  %1329 = vmatprep.subr.bf16.mxu0 %v1209
  %1330 = vmatpush1.bf16.msra.mxu0 %v1208
  %1331 = vmatprep.subr.bf16.mxu0 %v1212
  %1332 = vmatpush1.bf16.msra.mxu0 %v1211
  %1333 = vmatprep.subr.bf16.mxu0 %v1215
  %1334 = vmatpush1.bf16.msra.mxu0 %v1214
  %1335 = vmatprep.subr.bf16.mxu0 %v1218
  %1336 = vmatpush1.bf16.msra.mxu0 %v1217
  %1337 = vmatprep.subr.bf16.mxu0 %v1221
  %1338 = vmatpush1.bf16.msra.mxu0 %v1220
  %1339 = vmatprep.subr.bf16.mxu0 %v1224
  %1340 = vmatpush1.bf16.msra.mxu0 %v1223
  %1341 = vmatprep.subr.bf16.mxu0 %v1227
  %1342 = vmatpush1.bf16.msra.mxu0 %v1226
  %1343 = vmatprep.subr.bf16.mxu0 %v1230
  %1344 = vmatpush1.bf16.msra.mxu0 %v1229
  %1345 = vmatprep.subr.bf16.mxu0 %v1233
  %1346 = vmatpush1.bf16.msra.mxu0 %v1232
  %1347 = vmatprep.subr.bf16.mxu0 %v1236
  %1348 = vmatpush1.bf16.msra.mxu0 %v1235
  %1349 = vmatprep.subr.bf16.mxu0 %v1239
  %1350 = vmatpush1.bf16.msra.mxu0 %v1238
  %1351 = vmatprep.mubr.bf16.mxu0 %v1316
  %1352 = vmatmul.mubr.bf16.gmra.mrb[0].mxu0 %v1315
  %v1353 = vpop.f32.mrb[0].mxu0
  %v1354 = vadd.f32 0.0, %v1353
  %v1355 = vpop.f32.mrb[0].mxu0
  %v1356 = vadd.f32 0.0, %v1355
  %v1357 = vpop.f32.mrb[0].mxu0
  %v1358 = vpop.f32.mrb[0].mxu0
  %1359 = vdwg.mxu0
  %1360 = vmatprep.subr.bf16.mxu0 %v1242
  %1361 = vmatpush1.bf16.msra.mxu0 %v1241
  %1362 = vmatprep.subr.bf16.mxu0 %v1245
  %1363 = vmatpush1.bf16.msra.mxu0 %v1244
  %1364 = vmatprep.subr.bf16.mxu0 %v1248
  %1365 = vmatpush1.bf16.msra.mxu0 %v1247
  %1366 = vmatprep.subr.bf16.mxu0 %v1251
  %1367 = vmatpush1.bf16.msra.mxu0 %v1250
  %1368 = vmatprep.subr.bf16.mxu0 %v1254
  %1369 = vmatpush1.bf16.msra.mxu0 %v1253
  %1370 = vmatprep.subr.bf16.mxu0 %v1257
  %1371 = vmatpush1.bf16.msra.mxu0 %v1256
  %1372 = vmatprep.subr.bf16.mxu0 %v1260
  %1373 = vmatpush1.bf16.msra.mxu0 %v1259
  %1374 = vmatprep.subr.bf16.mxu0 %v1263
  %1375 = vmatpush1.bf16.msra.mxu0 %v1262
  %1376 = vmatprep.subr.bf16.mxu0 %v1266
  %1377 = vmatpush1.bf16.msra.mxu0 %v1265
  %1378 = vmatprep.subr.bf16.mxu0 %v1269
  %1379 = vmatpush1.bf16.msra.mxu0 %v1268
  %1380 = vmatprep.subr.bf16.mxu0 %v1272
  %1381 = vmatpush1.bf16.msra.mxu0 %v1271
  %1382 = vmatprep.subr.bf16.mxu0 %v1275
  %1383 = vmatpush1.bf16.msra.mxu0 %v1274
  %1384 = vmatprep.subr.bf16.mxu0 %v1278
  %1385 = vmatpush1.bf16.msra.mxu0 %v1277
  %1386 = vmatprep.subr.bf16.mxu0 %v1281
  %1387 = vmatpush1.bf16.msra.mxu0 %v1280
  %1388 = vmatprep.subr.bf16.mxu0 %v1284
  %1389 = vmatpush1.bf16.msra.mxu0 %v1283
  %1390 = vmatprep.subr.bf16.mxu0 %v1287
  %1391 = vmatpush1.bf16.msra.mxu0 %v1286
  %1392 = vmatprep.mubr.bf16.mxu0 %v1318
  %1393 = vmatmul.mubr.bf16.gmra.mrb[0].mxu0 %v1317
  %v1394 = vpop.f32.mrb[0].mxu0
  %v1395 = vadd.f32 %v1354, %v1394
  %v1396 = vpop.f32.mrb[0].mxu0
  %v1397 = vadd.f32 %v1356, %v1396
  %v1398 = vpop.f32.mrb[0].mxu0
  %v1399 = vpop.f32.mrb[0].mxu0
  %1400 = vdwg.mxu0
  %1401 = vmatprep.subr.bf16.mxu0 0
  %1402 = vmatpush1.bf16.msra.mxu0 %v1195
  %1403 = vmatprep.subr.bf16.mxu0 0
  %1404 = vmatpush1.bf16.msra.mxu0 %v1198
  %1405 = vmatprep.subr.bf16.mxu0 0
  %1406 = vmatpush1.bf16.msra.mxu0 %v1201
  %1407 = vmatprep.subr.bf16.mxu0 0
  %1408 = vmatpush1.bf16.msra.mxu0 %v1204
  %1409 = vmatprep.subr.bf16.mxu0 0
  %1410 = vmatpush1.bf16.msra.mxu0 %v1207
  %1411 = vmatprep.subr.bf16.mxu0 0
  %1412 = vmatpush1.bf16.msra.mxu0 %v1210
  %1413 = vmatprep.subr.bf16.mxu0 0
  %1414 = vmatpush1.bf16.msra.mxu0 %v1213
  %1415 = vmatprep.subr.bf16.mxu0 0
  %1416 = vmatpush1.bf16.msra.mxu0 %v1216
  %1417 = vmatprep.subr.bf16.mxu0 0
  %1418 = vmatpush1.bf16.msra.mxu0 %v1219
  %1419 = vmatprep.subr.bf16.mxu0 0
  %1420 = vmatpush1.bf16.msra.mxu0 %v1222
  %1421 = vmatprep.subr.bf16.mxu0 0
  %1422 = vmatpush1.bf16.msra.mxu0 %v1225
  %1423 = vmatprep.subr.bf16.mxu0 0
  %1424 = vmatpush1.bf16.msra.mxu0 %v1228
  %1425 = vmatprep.subr.bf16.mxu0 0
  %1426 = vmatpush1.bf16.msra.mxu0 %v1231
  %1427 = vmatprep.subr.bf16.mxu0 0
  %1428 = vmatpush1.bf16.msra.mxu0 %v1234
  %1429 = vmatprep.subr.bf16.mxu0 0
  %1430 = vmatpush1.bf16.msra.mxu0 %v1237
  %1431 = vmatprep.subr.bf16.mxu0 0
  %1432 = vmatpush1.bf16.msra.mxu0 %v1240
  %1433 = vmatprep.mubr.bf16.mxu0 %v1316
  %1434 = vmatmul.mubr.bf16.gmra.mrb[0].mxu0 %v1315
  %v1435 = vpop.f32.mrb[0].mxu0
  %v1436 = vadd.f32 0.0, %v1435
  %v1437 = vpop.f32.mrb[0].mxu0
  %v1438 = vpop.f32.mrb[0].mxu0
  %v1439 = vpop.f32.mrb[0].mxu0
  %1440 = vdwg.mxu0
  %1441 = vmatprep.subr.bf16.mxu0 0
  %1442 = vmatpush1.bf16.msra.mxu0 %v1243
  %1443 = vmatprep.subr.bf16.mxu0 0
  %1444 = vmatpush1.bf16.msra.mxu0 %v1246
  %1445 = vmatprep.subr.bf16.mxu0 0
  %1446 = vmatpush1.bf16.msra.mxu0 %v1249
  %1447 = vmatprep.subr.bf16.mxu0 0
  %1448 = vmatpush1.bf16.msra.mxu0 %v1252
  %1449 = vmatprep.subr.bf16.mxu0 0
  %1450 = vmatpush1.bf16.msra.mxu0 %v1255
  %1451 = vmatprep.subr.bf16.mxu0 0
  %1452 = vmatpush1.bf16.msra.mxu0 %v1258
  %1453 = vmatprep.subr.bf16.mxu0 0
  %1454 = vmatpush1.bf16.msra.mxu0 %v1261
  %1455 = vmatprep.subr.bf16.mxu0 0
  %1456 = vmatpush1.bf16.msra.mxu0 %v1264
  %1457 = vmatprep.subr.bf16.mxu0 0
  %1458 = vmatpush1.bf16.msra.mxu0 %v1267
  %1459 = vmatprep.subr.bf16.mxu0 0
  %1460 = vmatpush1.bf16.msra.mxu0 %v1270
  %1461 = vmatprep.subr.bf16.mxu0 0
  %1462 = vmatpush1.bf16.msra.mxu0 %v1273
  %1463 = vmatprep.subr.bf16.mxu0 0
  %1464 = vmatpush1.bf16.msra.mxu0 %v1276
  %1465 = vmatprep.subr.bf16.mxu0 0
  %1466 = vmatpush1.bf16.msra.mxu0 %v1279
  %1467 = vmatprep.subr.bf16.mxu0 0
  %1468 = vmatpush1.bf16.msra.mxu0 %v1282
  %1469 = vmatprep.subr.bf16.mxu0 0
  %1470 = vmatpush1.bf16.msra.mxu0 %v1285
  %1471 = vmatprep.subr.bf16.mxu0 0
  %1472 = vmatpush1.bf16.msra.mxu0 %v1288
  %1473 = vmatprep.mubr.bf16.mxu0 %v1318
  %1474 = vmatmul.mubr.bf16.gmra.mrb[0].mxu0 %v1317
  %v1475 = vpop.f32.mrb[0].mxu0
  %v1476 = vadd.f32 %v1436, %v1475
  %v1477 = vpop.f32.mrb[0].mxu0
  %v1478 = vpop.f32.mrb[0].mxu0
  %v1479 = vpop.f32.mrb[0].mxu0
  %1480 = vdwg.mxu0
  %v1481 = vld [vmem:[%s3] sm:$0xff]
  %v1482 = vld [vmem:[%s3 + $0x8] sm:$0xff]
  %v1483 = vld [vmem:[%s3 + $0x10] sm:$0xff]
  %v1484 = vld [vmem:[%s3 + $0x18] sm:$0xff]
  %v1485 = vpack.c.bf16 %v1395, %v1395
  %v1486 = vpack.c.bf16 %v1397, %v1397
  %v1487 = vpack.c.bf16 %v1476, %v1476
  %v1488 = vld [vmem:[%s2] sm:$0xf]
  %v1489 = vld [vmem:[%s2 + $0x4] sm:$0xf]
  %v1490 = vld [vmem:[%s2 + $0x8] sm:$0xf]
  %v1491 = vld [vmem:[%s2 + $0xc] sm:$0xf]
  %v1492 = vld [vmem:[%s2 + $0x10] sm:$0xf]
  %v1493 = vld [vmem:[%s2 + $0x14] sm:$0xf]
  %v1494 = vld [vmem:[%s2 + $0x18] sm:$0xf]
  %v1495 = vld [vmem:[%s2 + $0x1c] sm:$0xf]
  %v1496 = vld [vmem:[%s2 + $0x20] sm:$0xf]
  %v1497 = vld [vmem:[%s2 + $0x24] sm:$0xf]
  %v1498 = vld [vmem:[%s2 + $0x28] sm:$0xf]
  %v1499 = vld [vmem:[%s2 + $0x2c] sm:$0xf]
  %v1500 = vld [vmem:[%s2 + $0x30] sm:$0xf]
  %v1501 = vld [vmem:[%s2 + $0x34] sm:$0xf]
  %v1502 = vld [vmem:[%s2 + $0x38] sm:$0xf]
  %v1503 = vld [vmem:[%s2 + $0x3c] sm:$0xf]
  %v1504 = vld [vmem:[%s2 + $0x40] sm:$0xf]
  %v1505 = vld [vmem:[%s2 + $0x44] sm:$0xf]
  %v1506 = vld [vmem:[%s2 + $0x48] sm:$0xf]
  %v1507 = vld [vmem:[%s2 + $0x4c] sm:$0xf]
  %v1508 = vld [vmem:[%s2 + $0x50] sm:$0xf]
  %v1509 = vld [vmem:[%s2 + $0x54] sm:$0xf]
  %v1510 = vld [vmem:[%s2 + $0x58] sm:$0xf]
  %v1511 = vld [vmem:[%s2 + $0x5c] sm:$0xf]
  %v1512 = vld [vmem:[%s2 + $0x60] sm:$0xf]
  %v1513 = vld [vmem:[%s2 + $0x64] sm:$0xf]
  %v1514 = vld [vmem:[%s2 + $0x68] sm:$0xf]
  %v1515 = vld [vmem:[%s2 + $0x6c] sm:$0xf]
  %v1516 = vld [vmem:[%s2 + $0x70] sm:$0xf]
  %v1517 = vld [vmem:[%s2 + $0x74] sm:$0xf]
  %v1518 = vld [vmem:[%s2 + $0x78] sm:$0xf]
  %v1519 = vld [vmem:[%s2 + $0x7c] sm:$0xf]
  %v1520 = vld [vmem:[%s2 + $0x80] sm:$0xf]
  %v1521 = vld [vmem:[%s2 + $0x84] sm:$0xf]
  %v1522 = vld [vmem:[%s2 + $0x88] sm:$0xf]
  %v1523 = vld [vmem:[%s2 + $0x8c] sm:$0xf]
  %v1524 = vld [vmem:[%s2 + $0x90] sm:$0xf]
  %v1525 = vld [vmem:[%s2 + $0x94] sm:$0xf]
  %v1526 = vld [vmem:[%s2 + $0x98] sm:$0xf]
  %v1527 = vld [vmem:[%s2 + $0x9c] sm:$0xf]
  %v1528 = vld [vmem:[%s2 + $0xa0] sm:$0xf]
  %v1529 = vld [vmem:[%s2 + $0xa4] sm:$0xf]
  %v1530 = vld [vmem:[%s2 + $0xa8] sm:$0xf]
  %v1531 = vld [vmem:[%s2 + $0xac] sm:$0xf]
  %v1532 = vld [vmem:[%s2 + $0xb0] sm:$0xf]
  %v1533 = vld [vmem:[%s2 + $0xb4] sm:$0xf]
  %v1534 = vld [vmem:[%s2 + $0xb8] sm:$0xf]
  %v1535 = vld [vmem:[%s2 + $0xbc] sm:$0xf]
  %v1536 = vlaneseq
  %v1537 = vshrl.u32 %v1536, 7
  %v1538 = vsub.s32 0, %v1537
  %v1539 = vrot.slane %v1481, %v1538
  %v1588 = vunpack.c.l.b16 %v1488
  %v1589 = vunpack.c.l.b16 %v1489
  %v1590 = vunpack.c.l.b16 %v1490
  %v1591 = vunpack.c.l.b16 %v1491
  %v1592 = vunpack.c.l.b16 %v1492
  %v1593 = vunpack.c.l.b16 %v1493
  %v1594 = vunpack.c.l.b16 %v1494
  %v1595 = vunpack.c.l.b16 %v1495
  %v1596 = vunpack.c.l.b16 %v1496
  %v1597 = vunpack.c.l.b16 %v1497
  %v1598 = vunpack.c.l.b16 %v1498
  %v1599 = vunpack.c.l.b16 %v1499
  %v1600 = vunpack.c.l.b16 %v1500
  %v1601 = vunpack.c.l.b16 %v1501
  %v1602 = vunpack.c.l.b16 %v1502
  %v1603 = vunpack.c.l.b16 %v1503
  %v1604 = vunpack.c.l.b16 %v1504
  %v1605 = vunpack.c.l.b16 %v1505
  %v1606 = vunpack.c.l.b16 %v1506
  %v1607 = vunpack.c.l.b16 %v1507
  %v1608 = vunpack.c.l.b16 %v1508
  %v1609 = vunpack.c.l.b16 %v1509
  %v1610 = vunpack.c.l.b16 %v1510
  %v1611 = vunpack.c.l.b16 %v1511
  %v1612 = vunpack.c.l.b16 %v1512
  %v1613 = vunpack.c.l.b16 %v1513
  %v1614 = vunpack.c.l.b16 %v1514
  %v1615 = vunpack.c.l.b16 %v1515
  %v1616 = vunpack.c.l.b16 %v1516
  %v1617 = vunpack.c.l.b16 %v1517
  %v1618 = vunpack.c.l.b16 %v1518
  %v1619 = vunpack.c.l.b16 %v1519
  %v1620 = vunpack.c.l.b16 %v1520
  %v1621 = vunpack.c.l.b16 %v1521
  %v1622 = vunpack.c.l.b16 %v1522
  %v1623 = vunpack.c.l.b16 %v1523
  %v1624 = vunpack.c.l.b16 %v1524
  %v1625 = vunpack.c.l.b16 %v1525
  %v1626 = vunpack.c.l.b16 %v1526
  %v1627 = vunpack.c.l.b16 %v1527
  %v1628 = vunpack.c.l.b16 %v1528
  %v1629 = vunpack.c.l.b16 %v1529
  %v1630 = vunpack.c.l.b16 %v1530
  %v1631 = vunpack.c.l.b16 %v1531
  %v1632 = vunpack.c.l.b16 %v1532
  %v1633 = vunpack.c.l.b16 %v1533
  %v1634 = vunpack.c.l.b16 %v1534
  %v1635 = vunpack.c.l.b16 %v1535
  %v1636 = vpack.c.b16 %v1589, %v1588
  %v1637 = vpack.c.b16 %v1591, %v1590
  %v1638 = vpack.c.b16 %v1593, %v1592
  %v1639 = vpack.c.b16 %v1595, %v1594
  %v1640 = vpack.c.b16 %v1597, %v1596
  %v1641 = vpack.c.b16 %v1599, %v1598
  %v1642 = vpack.c.b16 %v1601, %v1600
  %v1643 = vpack.c.b16 %v1603, %v1602
  %v1644 = vpack.c.b16 %v1605, %v1604
  %v1645 = vpack.c.b16 %v1607, %v1606
  %v1646 = vpack.c.b16 %v1609, %v1608
  %v1647 = vpack.c.b16 %v1611, %v1610
  %v1648 = vpack.c.b16 %v1613, %v1612
  %v1649 = vpack.c.b16 %v1615, %v1614
  %v1650 = vpack.c.b16 %v1617, %v1616
  %v1651 = vpack.c.b16 %v1619, %v1618
  %v1652 = vpack.c.b16 %v1621, %v1620
  %v1653 = vpack.c.b16 %v1623, %v1622
  %v1654 = vpack.c.b16 %v1625, %v1624
  %v1655 = vpack.c.b16 %v1627, %v1626
  %v1656 = vpack.c.b16 %v1629, %v1628
  %v1657 = vpack.c.b16 %v1631, %v1630
  %v1658 = vpack.c.b16 %v1633, %v1632
  %v1659 = vpack.c.b16 %v1635, %v1634
  %1684 = vmatprep.subr.bf16.mxu0 0
  %1685 = vmatpush1.bf16.msra.mxu0 %v1636
  %1686 = vmatprep.subr.bf16.mxu0 0
  %1687 = vmatpush1.bf16.msra.mxu0 %v1637
  %1688 = vmatprep.subr.bf16.mxu0 0
  %1689 = vmatpush1.bf16.msra.mxu0 %v1638
  %1690 = vmatprep.subr.bf16.mxu0 0
  %1691 = vmatpush1.bf16.msra.mxu0 %v1639
  %1692 = vmatprep.subr.bf16.mxu0 0
  %1693 = vmatpush1.bf16.msra.mxu0 %v1640
  %1694 = vmatprep.subr.bf16.mxu0 0
  %1695 = vmatpush1.bf16.msra.mxu0 %v1641
  %1696 = vmatprep.subr.bf16.mxu0 0
  %1697 = vmatpush1.bf16.msra.mxu0 %v1642
  %1698 = vmatprep.subr.bf16.mxu0 0
  %1699 = vmatpush1.bf16.msra.mxu0 %v1643
  %1700 = vmatprep.subr.bf16.mxu0 0
  %1701 = vmatpush1.bf16.msra.mxu0 %v1644
  %1702 = vmatprep.subr.bf16.mxu0 0
  %1703 = vmatpush1.bf16.msra.mxu0 %v1645
  %1704 = vmatprep.subr.bf16.mxu0 0
  %1705 = vmatpush1.bf16.msra.mxu0 %v1646
  %1706 = vmatprep.subr.bf16.mxu0 0
  %1707 = vmatpush1.bf16.msra.mxu0 %v1647
  %1708 = vmatprep.subr.bf16.mxu0 0
  %1709 = vmatpush1.bf16.msra.mxu0 %v1648
  %1710 = vmatprep.subr.bf16.mxu0 0
  %1711 = vmatpush1.bf16.msra.mxu0 %v1649
  %1712 = vmatprep.subr.bf16.mxu0 0
  %1713 = vmatpush1.bf16.msra.mxu0 %v1650
  %1714 = vmatprep.subr.bf16.mxu0 0
  %1715 = vmatpush1.bf16.msra.mxu0 %v1651
  %1716 = vmatprep.mubr.bf16.mxu0 %v1486
  %1717 = vmatmul.mubr.bf16.gmra.mrb[0].mxu0 %v1485
  %v1718 = vpop.f32.mrb[0].mxu0
  %v1719 = vadd.f32 %v1539, %v1718
  %v1720 = vpop.f32.mrb[0].mxu0
  %v1721 = vpop.f32.mrb[0].mxu0
  %v1722 = vpop.f32.mrb[0].mxu0
  %1723 = vdwg.mxu0
  %1724 = vmatprep.subr.bf16.mxu0 0
  %1725 = vmatpush1.bf16.msra.mxu0 %v1652
  %1726 = vmatprep.subr.bf16.mxu0 0
  %1727 = vmatpush1.bf16.msra.mxu0 %v1653
  %1728 = vmatprep.subr.bf16.mxu0 0
  %1729 = vmatpush1.bf16.msra.mxu0 %v1654
  %1730 = vmatprep.subr.bf16.mxu0 0
  %1731 = vmatpush1.bf16.msra.mxu0 %v1655
  %1732 = vmatprep.subr.bf16.mxu0 0
  %1733 = vmatpush1.bf16.msra.mxu0 %v1656
  %1734 = vmatprep.subr.bf16.mxu0 0
  %1735 = vmatpush1.bf16.msra.mxu0 %v1657
  %1736 = vmatprep.subr.bf16.mxu0 0
  %1737 = vmatpush1.bf16.msra.mxu0 %v1658
  %1738 = vmatprep.subr.bf16.mxu0 0
  %1739 = vmatpush1.bf16.msra.mxu0 %v1659
  %1740 = vmatprep.subr.bf16.mxu0 0
  %1741 = vmatpush1.bf16.msra.mxu0 0
  %1742 = vmatprep.subr.bf16.mxu0 0
  %1743 = vmatpush1.bf16.msra.mxu0 0
  %1744 = vmatprep.subr.bf16.mxu0 0
  %1745 = vmatpush1.bf16.msra.mxu0 0
  %1746 = vmatprep.subr.bf16.mxu0 0
  %1747 = vmatpush1.bf16.msra.mxu0 0
  %1748 = vmatprep.subr.bf16.mxu0 0
  %1749 = vmatpush1.bf16.msra.mxu0 0
  %1750 = vmatprep.subr.bf16.mxu0 0
  %1751 = vmatpush1.bf16.msra.mxu0 0
  %1752 = vmatprep.subr.bf16.mxu0 0
  %1753 = vmatpush1.bf16.msra.mxu0 0
  %1754 = vmatprep.subr.bf16.mxu0 0
  %1755 = vmatpush1.bf16.msra.mxu0 0
  %1756 = vmatprep.mubr.bf16.mxu0 0
  %1757 = vmatmul.mubr.bf16.gmra.mrb[0].mxu0 %v1487
  %v1758 = vpop.f32.mrb[0].mxu0
  %v1759 = vadd.f32 %v1719, %v1758
  %v1760 = vpop.f32.mrb[0].mxu0
  %v1761 = vpop.f32.mrb[0].mxu0
  %v1762 = vpop.f32.mrb[0].mxu0
  %1763 = vdwg.mxu0
  %vm1764 = vcmp.lt.s32.totalorder %v1292, 4
  %vm1765 = vcmp.ge.s32.totalorder %v1292, 4
  %vm1766 = vcmp.lt.s32.totalorder %v1292, 12
  %vm1767 = vmand %vm1765, %vm1766
  %vm1768 = vcmp.ge.s32.totalorder %v1292, 12
  %vm1769 = vcmp.lt.s32.totalorder %v1292, 24
  %vm1770 = vmand %vm1768, %vm1769
  %vm1771 = vcmp.eq.s32.totalorder %v1292, 40
  %vm1772 = vmor %vm1770, %vm1771
  %v1773 = vmax.f32 %v1759, 0.0
  %v1774 = vsel %vm1764, %v1773, %v1759
  %1776 = vset.pattern.permute.xlu0 0
  %1777 = vperm.xlu0 %1776, %v1774
  %v1778 = vpop.permute.xlu0 %1777
  %v1780 = vlaneseq
  %v1781 = vshrl.u32 %v1780, 7
  %v1782 = vsub.s32 1, %v1781
  %v1783 = vrot.slane %v1481, %v1782
  %v1784 = vmul.f32 %v1778, %v1783
  %1785 = vset.pattern.permute.xlu0 1
  %1786 = vperm.xlu0 %1785, %v1774
  %v1787 = vpop.permute.xlu0 %1786
  %v1789 = vlaneseq
  %v1790 = vshrl.u32 %v1789, 7
  %v1791 = vsub.s32 2, %v1790
  %v1792 = vrot.slane %v1481, %v1791
  %v1793 = vmul.f32 %v1787, %v1792
  %v1794 = vadd.f32 %v1784, %v1793
  %1795 = vset.pattern.permute.xlu0 2
  %1796 = vperm.xlu0 %1795, %v1774
  %v1797 = vpop.permute.xlu0 %1796
  %v1799 = vlaneseq
  %v1800 = vshrl.u32 %v1799, 7
  %v1801 = vsub.s32 3, %v1800
  %v1802 = vrot.slane %v1481, %v1801
  %v1803 = vmul.f32 %v1797, %v1802
  %v1804 = vadd.f32 %v1794, %v1803
  %1805 = vset.pattern.permute.xlu0 3
  %1806 = vperm.xlu0 %1805, %v1774
  %v1807 = vpop.permute.xlu0 %1806
  %v1809 = vlaneseq
  %v1810 = vshrl.u32 %v1809, 7
  %v1811 = vsub.s32 4, %v1810
  %v1812 = vrot.slane %v1481, %v1811
  %v1813 = vmul.f32 %v1807, %v1812
  %v1814 = vadd.f32 %v1804, %v1813
  %v1815 = vadd.f32 %v1774, %v1814
  %v1816 = vmax.f32 %v1815, 0.0
  %v1817 = vsel %vm1767, %v1816, %v1815
  %1819 = vset.pattern.permute.xlu0 4
  %1820 = vperm.xlu0 %1819, %v1817
  %v1821 = vpop.permute.xlu0 %1820
  %v1823 = vlaneseq
  %v1824 = vshrl.u32 %v1823, 7
  %v1825 = vsub.s32 5, %v1824
  %v1826 = vrot.slane %v1481, %v1825
  %v1827 = vmul.f32 %v1821, %v1826
  %1828 = vset.pattern.permute.xlu0 5
  %1829 = vperm.xlu0 %1828, %v1817
  %v1830 = vpop.permute.xlu0 %1829
  %v1832 = vlaneseq
  %v1833 = vshrl.u32 %v1832, 7
  %v1834 = vsub.s32 6, %v1833
  %v1835 = vrot.slane %v1481, %v1834
  %v1836 = vmul.f32 %v1830, %v1835
  %v1837 = vadd.f32 %v1827, %v1836
  %1838 = vset.pattern.permute.xlu0 6
  %1839 = vperm.xlu0 %1838, %v1817
  %v1840 = vpop.permute.xlu0 %1839
  %v1842 = vlaneseq
  %v1843 = vshrl.u32 %v1842, 7
  %v1844 = vsub.s32 7, %v1843
  %v1845 = vrot.slane %v1481, %v1844
  %v1846 = vmul.f32 %v1840, %v1845
  %v1847 = vadd.f32 %v1837, %v1846
  %1848 = vset.pattern.permute.xlu0 7
  %1849 = vperm.xlu0 %1848, %v1817
  %v1850 = vpop.permute.xlu0 %1849
  %v1852 = vlaneseq
  %v1853 = vshrl.u32 %v1852, 7
  %v1854 = vsub.s32 0, %v1853
  %v1855 = vrot.slane %v1482, %v1854
  %v1856 = vmul.f32 %v1850, %v1855
  %v1857 = vadd.f32 %v1847, %v1856
  %1858 = vset.pattern.permute.xlu0 8
  %1859 = vperm.xlu0 %1858, %v1817
  %v1860 = vpop.permute.xlu0 %1859
  %v1862 = vlaneseq
  %v1863 = vshrl.u32 %v1862, 7
  %v1864 = vsub.s32 1, %v1863
  %v1865 = vrot.slane %v1482, %v1864
  %v1866 = vmul.f32 %v1860, %v1865
  %v1867 = vadd.f32 %v1857, %v1866
  %1868 = vset.pattern.permute.xlu0 9
  %1869 = vperm.xlu0 %1868, %v1817
  %v1870 = vpop.permute.xlu0 %1869
  %v1872 = vlaneseq
  %v1873 = vshrl.u32 %v1872, 7
  %v1874 = vsub.s32 2, %v1873
  %v1875 = vrot.slane %v1482, %v1874
  %v1876 = vmul.f32 %v1870, %v1875
  %v1877 = vadd.f32 %v1867, %v1876
  %1878 = vset.pattern.permute.xlu0 10
  %1879 = vperm.xlu0 %1878, %v1817
  %v1880 = vpop.permute.xlu0 %1879
  %v1882 = vlaneseq
  %v1883 = vshrl.u32 %v1882, 7
  %v1884 = vsub.s32 3, %v1883
  %v1885 = vrot.slane %v1482, %v1884
  %v1886 = vmul.f32 %v1880, %v1885
  %v1887 = vadd.f32 %v1877, %v1886
  %1888 = vset.pattern.permute.xlu0 11
  %1889 = vperm.xlu0 %1888, %v1817
  %v1890 = vpop.permute.xlu0 %1889
  %v1892 = vlaneseq
  %v1893 = vshrl.u32 %v1892, 7
  %v1894 = vsub.s32 4, %v1893
  %v1895 = vrot.slane %v1482, %v1894
  %v1896 = vmul.f32 %v1890, %v1895
  %v1897 = vadd.f32 %v1887, %v1896
  %v1898 = vadd.f32 %v1817, %v1897
  %v1899 = vmax.f32 %v1898, 0.0
  %v1900 = vsel %vm1772, %v1899, %v1898
  %1902 = vset.pattern.permute.xlu0 40
  %1903 = vperm.xlu0 %1902, %v1900
  %v1904 = vpop.permute.xlu0 %1903
  %v1906 = vlaneseq
  %v1907 = vshrl.u32 %v1906, 7
  %v1908 = vsub.s32 5, %v1907
  %v1909 = vrot.slane %v1482, %v1908
  %v1910 = vmul.f32 %v1904, %v1909
  %1911 = vset.pattern.permute.xlu0 12
  %1912 = vperm.xlu0 %1911, %v1900
  %v1913 = vpop.permute.xlu0 %1912
  %v1915 = vlaneseq
  %v1916 = vshrl.u32 %v1915, 7
  %v1917 = vsub.s32 6, %v1916
  %v1918 = vrot.slane %v1482, %v1917
  %v1919 = vmul.f32 %v1913, %v1918
  %v1920 = vadd.f32 %v1910, %v1919
  %1921 = vset.pattern.permute.xlu0 13
  %1922 = vperm.xlu0 %1921, %v1900
  %v1923 = vpop.permute.xlu0 %1922
  %v1925 = vlaneseq
  %v1926 = vshrl.u32 %v1925, 7
  %v1927 = vsub.s32 7, %v1926
  %v1928 = vrot.slane %v1482, %v1927
  %v1929 = vmul.f32 %v1923, %v1928
  %v1930 = vadd.f32 %v1920, %v1929
  %1931 = vset.pattern.permute.xlu0 14
  %1932 = vperm.xlu0 %1931, %v1900
  %v1933 = vpop.permute.xlu0 %1932
  %v1935 = vlaneseq
  %v1936 = vshrl.u32 %v1935, 7
  %v1937 = vsub.s32 0, %v1936
  %v1938 = vrot.slane %v1483, %v1937
  %v1939 = vmul.f32 %v1933, %v1938
  %v1940 = vadd.f32 %v1930, %v1939
  %1941 = vset.pattern.permute.xlu0 15
  %1942 = vperm.xlu0 %1941, %v1900
  %v1943 = vpop.permute.xlu0 %1942
  %v1945 = vlaneseq
  %v1946 = vshrl.u32 %v1945, 7
  %v1947 = vsub.s32 1, %v1946
  %v1948 = vrot.slane %v1483, %v1947
  %v1949 = vmul.f32 %v1943, %v1948
  %v1950 = vadd.f32 %v1940, %v1949
  %1951 = vset.pattern.permute.xlu0 16
  %1952 = vperm.xlu0 %1951, %v1900
  %v1953 = vpop.permute.xlu0 %1952
  %v1955 = vlaneseq
  %v1956 = vshrl.u32 %v1955, 7
  %v1957 = vsub.s32 2, %v1956
  %v1958 = vrot.slane %v1483, %v1957
  %v1959 = vmul.f32 %v1953, %v1958
  %v1960 = vadd.f32 %v1950, %v1959
  %1961 = vset.pattern.permute.xlu0 17
  %1962 = vperm.xlu0 %1961, %v1900
  %v1963 = vpop.permute.xlu0 %1962
  %v1965 = vlaneseq
  %v1966 = vshrl.u32 %v1965, 7
  %v1967 = vsub.s32 3, %v1966
  %v1968 = vrot.slane %v1483, %v1967
  %v1969 = vmul.f32 %v1963, %v1968
  %v1970 = vadd.f32 %v1960, %v1969
  %1971 = vset.pattern.permute.xlu0 18
  %1972 = vperm.xlu0 %1971, %v1900
  %v1973 = vpop.permute.xlu0 %1972
  %v1975 = vlaneseq
  %v1976 = vshrl.u32 %v1975, 7
  %v1977 = vsub.s32 4, %v1976
  %v1978 = vrot.slane %v1483, %v1977
  %v1979 = vmul.f32 %v1973, %v1978
  %v1980 = vadd.f32 %v1970, %v1979
  %1981 = vset.pattern.permute.xlu0 19
  %1982 = vperm.xlu0 %1981, %v1900
  %v1983 = vpop.permute.xlu0 %1982
  %v1985 = vlaneseq
  %v1986 = vshrl.u32 %v1985, 7
  %v1987 = vsub.s32 5, %v1986
  %v1988 = vrot.slane %v1483, %v1987
  %v1989 = vmul.f32 %v1983, %v1988
  %v1990 = vadd.f32 %v1980, %v1989
  %1991 = vset.pattern.permute.xlu0 20
  %1992 = vperm.xlu0 %1991, %v1900
  %v1993 = vpop.permute.xlu0 %1992
  %v1995 = vlaneseq
  %v1996 = vshrl.u32 %v1995, 7
  %v1997 = vsub.s32 6, %v1996
  %v1998 = vrot.slane %v1483, %v1997
  %v1999 = vmul.f32 %v1993, %v1998
  %v2000 = vadd.f32 %v1990, %v1999
  %2001 = vset.pattern.permute.xlu0 21
  %2002 = vperm.xlu0 %2001, %v1900
  %v2003 = vpop.permute.xlu0 %2002
  %v2005 = vlaneseq
  %v2006 = vshrl.u32 %v2005, 7
  %v2007 = vsub.s32 7, %v2006
  %v2008 = vrot.slane %v1483, %v2007
  %v2009 = vmul.f32 %v2003, %v2008
  %v2010 = vadd.f32 %v2000, %v2009
  %2011 = vset.pattern.permute.xlu0 22
  %2012 = vperm.xlu0 %2011, %v1900
  %v2013 = vpop.permute.xlu0 %2012
  %v2015 = vlaneseq
  %v2016 = vshrl.u32 %v2015, 7
  %v2017 = vsub.s32 0, %v2016
  %v2018 = vrot.slane %v1484, %v2017
  %v2019 = vmul.f32 %v2013, %v2018
  %v2020 = vadd.f32 %v2010, %v2019
  %2021 = vset.pattern.permute.xlu0 23
  %2022 = vperm.xlu0 %2021, %v1900
  %v2023 = vpop.permute.xlu0 %2022
  %v2025 = vlaneseq
  %v2026 = vshrl.u32 %v2025, 7
  %v2027 = vsub.s32 1, %v2026
  %v2028 = vrot.slane %v1484, %v2027
  %v2029 = vmul.f32 %v2023, %v2028
  %v2030 = vadd.f32 %v2020, %v2029
  %v2031 = vadd.f32 %v1900, %v2030
  %2032 = vst [vmem:[%s4] sm:$0x3] %v2031
  %v2036 = vcombine.low %v1395, %v1397
  %v2038 = vunpack.c.l.s4 1983009808
  %v2039 = vunpack.c.0.s8 %v2038
  %v2040 = vlaneseq
  %v2041 = vshrl.u32 %v2040, 7
  %v2042 = vsub.s32 %v2039, %v2041
  %v2043 = vrot.slane %v2036, %v2042
  %v2045 = vunpack.c.l.s4 1983009808
  %v2046 = vunpack.c.0.s8 %v2045
  %v2047 = vlaneseq
  %v2048 = vshrl.u32 %v2047, 7
  %v2049 = vsub.s32 %v2046, %v2048
  %v2050 = vrot.slane %v1476, %v2049
  %v2051 = vcombine.low %v2043, %v2050
  %2053 = vst [vmem:[%s4 + $0x2] sm:$0x3f] %v2051
  // Predicated region
  $region18: #{custom_network_forward.1} parent=0 // pred_check
    _
  $region19: #{custom_network_forward.1} parent=0 // pred_check_branch
    %2055 = sbr.rel (0) target = $region21
  $region20: #{custom_network_forward.1} parent=0 // pred_region
    _
  $region21: #{custom_network_forward.1} parent=0 // pred_fallthru
    _
  // Predicated region
  $region22: #{custom_network_forward.1} parent=0 // pred_check
    _
  $region23: #{custom_network_forward.1} parent=0 // pred_check_branch
    %2057 = sbr.rel (0) target = $region25
  $region24: #{custom_network_forward.1} parent=0 // pred_region
    _
  $region25: #{custom_network_forward.1} parent=0 // pred_fallthru
    _

</llo_original>
